<compile_context>
chip_gen: v5e
topology: v5e:2x2
jax: 0.10.0
libtpu: 0.0.40
codegen_flags: <defaults>
</compile_context>

<pallas_src>
import jax
import jax.numpy as jnp
from jax.experimental import pallas as pl
from jax.experimental.pallas import tpu as pltpu

HIDDEN_SIZE = 512
_LANE = 128
_NEG_INF = -1e30  # bias for padded output columns -> exp() underflows to 0


def _round_up(n, m):
    return ((n + m - 1) // m) * m


def _qfc_kernel(x_ref, w1_ref, b1_ref, w2_ref, b2_ref, w3_ref, b3_ref, o_ref):
    # fc_in + ReLU   (bf16 MXU operands, f32 accumulation)
    h1 = jnp.dot(x_ref[...], w1_ref[...], preferred_element_type=jnp.float32)
    h1 = jnp.maximum(h1 + b1_ref[...], 0.0).astype(jnp.bfloat16)

    # fc + ReLU
    h2 = jnp.dot(h1, w2_ref[...], preferred_element_type=jnp.float32)
    h2 = jnp.maximum(h2 + b2_ref[...], 0.0).astype(jnp.bfloat16)

    # fc_out (padded columns get -1e30 bias -> zero softmax weight)
    logits = jnp.dot(h2, w3_ref[...], preferred_element_type=jnp.float32) + b3_ref[...]

    # softmax over dim=1 (feature axis), f32 epilogue, EUP reciprocal
    m = jnp.max(logits, axis=1, keepdims=True)
    e = jnp.exp(logits - m)
    denom = jnp.sum(e, axis=1, keepdims=True)
    o_ref[...] = (e * pl.reciprocal(denom, approx=True)).astype(o_ref.dtype)


def init_params(key, input_size, output_size):
    """Deterministic init mirroring nn.Linear (weights stored transposed, f32)."""
    k1, k2, k3, k4, k5, k6 = jax.random.split(key, 6)

    def linear_init(kw, kb, fan_in, fan_out):
        bound = 1.0 / jnp.sqrt(fan_in)  # PyTorch default: U(-1/sqrt(fan_in), ...)
        w = jax.random.uniform(kw, (fan_in, fan_out), jnp.float32, -bound, bound)
        b = jax.random.uniform(kb, (1, fan_out), jnp.float32, -bound, bound)
        return w, b

    w1, b1 = linear_init(k1, k2, input_size, HIDDEN_SIZE)
    w2, b2 = linear_init(k3, k4, HIDDEN_SIZE, HIDDEN_SIZE)
    w3, b3 = linear_init(k5, k6, HIDDEN_SIZE, output_size)
    return {"w1": w1, "b1": b1, "w2": w2, "b2": b2, "w3": w3, "b3": b3}


def prepare_params(params):
    """One-time prep: pad feature dims to 128-lane multiples, cast matmul operands
    to bf16 (biases stay f32; padded fc_out bias columns set to -1e30)."""
    w1, b1 = params["w1"], params["b1"]
    w2, b2 = params["w2"], params["b2"]
    w3, b3 = params["w3"], params["b3"]
    in_size, hidden = w1.shape
    out_size = w3.shape[1]
    in_p = _round_up(in_size, _LANE)
    out_p = _round_up(out_size, _LANE)

    w1p = jnp.zeros((in_p, hidden), jnp.bfloat16).at[:in_size, :].set(
        w1.astype(jnp.bfloat16))
    w3p = jnp.zeros((hidden, out_p), jnp.bfloat16).at[:, :out_size].set(
        w3.astype(jnp.bfloat16))
    b3p = jnp.full((1, out_p), _NEG_INF, jnp.float32).at[:, :out_size].set(
        b3.astype(jnp.float32))

    return {
        "w1": w1p, "b1": b1.astype(jnp.float32),
        "w2": w2.astype(jnp.bfloat16), "b2": b2.astype(jnp.float32),
        "w3": w3p, "b3": b3p,
        "in_size": int(in_size), "out_size": int(out_size),
    }


def q_function_fc_forward(x, prep, *, tile_b=128):
    """x: [B, input_size] float32. prep: output of prepare_params()."""
    B, in_size = x.shape
    assert in_size == prep["in_size"]
    in_p, hidden = prep["w1"].shape
    out_p = prep["w3"].shape[1]
    out_size = prep["out_size"]

    # Pad batch to a tile multiple and features to the lane-padded width; bf16 operands.
    b_pad = _round_up(B, tile_b)
    x_p = jnp.zeros((b_pad, in_p), jnp.bfloat16).at[:B, :in_size].set(
        x.astype(jnp.bfloat16))

    grid = (b_pad // tile_b,)
    const = lambda a: pl.BlockSpec(a.shape, lambda i: (0,) * a.ndim)

    flops = 2 * b_pad * (in_p * hidden + hidden * hidden + hidden * out_p)
    transcendentals = b_pad * out_p
    bytes_accessed = (
        x_p.size * 2
        + prep["w1"].size * 2 + prep["w2"].size * 2 + prep["w3"].size * 2
        + (prep["b1"].size + prep["b2"].size + prep["b3"].size) * 4
        + b_pad * out_p * 4)

    out = pl.pallas_call(
        _qfc_kernel,
        out_shape=jax.ShapeDtypeStruct((b_pad, out_p), jnp.float32),
        grid=grid,
        in_specs=[
            pl.BlockSpec((tile_b, in_p), lambda i: (i, 0)),  # x: tiled over batch
            const(prep["w1"]), const(prep["b1"]),            # weights/biases resident
            const(prep["w2"]), const(prep["b2"]),
            const(prep["w3"]), const(prep["b3"]),
        ],
        out_specs=pl.BlockSpec((tile_b, out_p), lambda i: (i, 0)),
        compiler_params=pltpu.CompilerParams(
            dimension_semantics=("parallel",)),
        cost_estimate=pl.CostEstimate(
            flops=int(flops),
            transcendentals=int(transcendentals),
            bytes_accessed=int(bytes_accessed)),
    )(x_p, prep["w1"], prep["b1"], prep["w2"], prep["b2"], prep["w3"], prep["b3"])

    return out[:B, :out_size]


def _reference(x, params):
    """Pure-JAX f32 reference of the PyTorch forward."""
    h1 = jnp.maximum(x @ params["w1"] + params["b1"], 0.0)
    h2 = jnp.maximum(h1 @ params["w2"] + params["b2"], 0.0)
    logits = h2 @ params["w3"] + params["b3"]
    return jax.nn.softmax(logits, axis=1)


if __name__ == "__main__":
    key = jax.random.PRNGKey(0)
    k_params, k_x = jax.random.split(key)

    batch = 2
    input_size = 32
    output_size = 8

    params = init_params(k_params, input_size, output_size)
    prep = prepare_params(params)
    x = jax.random.normal(k_x, (batch, input_size), dtype=jnp.float32)

    out = q_function_fc_forward(x, prep, tile_b=128)
    out = jax.block_until_ready(out)

    assert out.shape == (batch, output_size)

    # rows of a softmax must sum to ~1 (approx-reciprocal tolerance)
    row_sums = jnp.sum(out, axis=1)
    assert bool(jnp.all(jnp.abs(row_sums - 1.0) < 1e-2)), row_sums

    # match f32 reference within bf16-matmul tolerance
    ref = _reference(x, params)
    max_err = float(jnp.max(jnp.abs(out - ref)))
    assert max_err < 5e-2, max_err

    print("KERNEL_OK")
</pallas_src>

<mosaic_0001>
module attributes {stable_mosaic.version = 11 : i64} {
  func.func @_qfc_kernel(%arg0: i32, %arg1: memref<128x128xbf16, #tpu.memory_space<vmem>>, %arg2: memref<128x512xbf16, #tpu.memory_space<vmem>>, %arg3: memref<1x512xf32, #tpu.memory_space<vmem>>, %arg4: memref<512x512xbf16, #tpu.memory_space<vmem>>, %arg5: memref<1x512xf32, #tpu.memory_space<vmem>>, %arg6: memref<512x128xbf16, #tpu.memory_space<vmem>>, %arg7: memref<1x128xf32, #tpu.memory_space<vmem>>, %arg8: memref<128x128xf32, #tpu.memory_space<vmem>>) attributes {dimension_semantics = [#tpu.dimension_semantics<parallel>], iteration_bounds = array<i64: 1>, scalar_prefetch = 0 : i64, scratch_operands = 0 : i64, tpu.core_type = #tpu.core_type<tc>, window_params = [{transform_indices = @transform_0, window_bounds = array<i64: 128, 128>}, {pipeline_mode = #tpu.pipeline_mode<synchronous>, transform_indices = @transform_1, window_bounds = array<i64: 128, 512>}, {pipeline_mode = #tpu.pipeline_mode<synchronous>, transform_indices = @transform_2, window_bounds = array<i64: 1, 512>}, {pipeline_mode = #tpu.pipeline_mode<synchronous>, transform_indices = @transform_3, window_bounds = array<i64: 512, 512>}, {pipeline_mode = #tpu.pipeline_mode<synchronous>, transform_indices = @transform_4, window_bounds = array<i64: 1, 512>}, {pipeline_mode = #tpu.pipeline_mode<synchronous>, transform_indices = @transform_5, window_bounds = array<i64: 512, 128>}, {pipeline_mode = #tpu.pipeline_mode<synchronous>, transform_indices = @transform_6, window_bounds = array<i64: 1, 128>}, {transform_indices = @transform_7, window_bounds = array<i64: 128, 128>}]} {
    %c0 = arith.constant 0 : index
    %c0_0 = arith.constant 0 : index
    %0 = vector.load %arg1[%c0, %c0_0] : memref<128x128xbf16, #tpu.memory_space<vmem>>, vector<128x128xbf16>
    %c0_1 = arith.constant 0 : index
    %c0_2 = arith.constant 0 : index
    %1 = vector.load %arg2[%c0_1, %c0_2] : memref<128x512xbf16, #tpu.memory_space<vmem>>, vector<128x512xbf16>
    %cst = arith.constant dense<0.000000e+00> : vector<128x512xf32>
    %2 = tpu.matmul %0, %1, %cst {dimension_numbers = #tpu.dot_dimension_numbers<[1], [0], [0], [1], [0, 0, 1, 1], [], []>} : vector<128x128xbf16>, vector<128x512xbf16>, vector<128x512xf32> -> vector<128x512xf32>
    %c0_3 = arith.constant 0 : index
    %c0_4 = arith.constant 0 : index
    %3 = vector.load %arg3[%c0_3, %c0_4] : memref<1x512xf32, #tpu.memory_space<vmem>>, vector<1x512xf32>
    %4 = vector.broadcast %3 : vector<1x512xf32> to vector<128x512xf32>
    %5 = arith.addf %2, %4 : vector<128x512xf32>
    %cst_5 = arith.constant 0.000000e+00 : f32
    %6 = vector.broadcast %cst_5 : f32 to vector<128x512xf32>
    %7 = arith.maximumf %5, %6 : vector<128x512xf32>
    %8 = arith.truncf %7 : vector<128x512xf32> to vector<128x512xbf16>
    %c0_6 = arith.constant 0 : index
    %c0_7 = arith.constant 0 : index
    %9 = vector.load %arg4[%c0_6, %c0_7] : memref<512x512xbf16, #tpu.memory_space<vmem>>, vector<512x512xbf16>
    %cst_8 = arith.constant dense<0.000000e+00> : vector<128x512xf32>
    %10 = tpu.matmul %8, %9, %cst_8 {dimension_numbers = #tpu.dot_dimension_numbers<[1], [0], [0], [1], [0, 0, 1, 1], [], []>} : vector<128x512xbf16>, vector<512x512xbf16>, vector<128x512xf32> -> vector<128x512xf32>
    %c0_9 = arith.constant 0 : index
    %c0_10 = arith.constant 0 : index
    %11 = vector.load %arg5[%c0_9, %c0_10] : memref<1x512xf32, #tpu.memory_space<vmem>>, vector<1x512xf32>
    %12 = vector.broadcast %11 : vector<1x512xf32> to vector<128x512xf32>
    %13 = arith.addf %10, %12 : vector<128x512xf32>
    %cst_11 = arith.constant 0.000000e+00 : f32
    %14 = vector.broadcast %cst_11 : f32 to vector<128x512xf32>
    %15 = arith.maximumf %13, %14 : vector<128x512xf32>
    %16 = arith.truncf %15 : vector<128x512xf32> to vector<128x512xbf16>
    %c0_12 = arith.constant 0 : index
    %c0_13 = arith.constant 0 : index
    %17 = vector.load %arg6[%c0_12, %c0_13] : memref<512x128xbf16, #tpu.memory_space<vmem>>, vector<512x128xbf16>
    %cst_14 = arith.constant dense<0.000000e+00> : vector<128x128xf32>
    %18 = tpu.matmul %16, %17, %cst_14 {dimension_numbers = #tpu.dot_dimension_numbers<[1], [0], [0], [1], [0, 0, 1, 1], [], []>} : vector<128x512xbf16>, vector<512x128xbf16>, vector<128x128xf32> -> vector<128x128xf32>
    %c0_15 = arith.constant 0 : index
    %c0_16 = arith.constant 0 : index
    %19 = vector.load %arg7[%c0_15, %c0_16] : memref<1x128xf32, #tpu.memory_space<vmem>>, vector<1x128xf32>
    %20 = vector.broadcast %19 : vector<1x128xf32> to vector<128x128xf32>
    %21 = arith.addf %18, %20 : vector<128x128xf32>
    %cst_17 = arith.constant dense<0xFF800000> : vector<128xf32>
    %22 = vector.multi_reduction <maximumf>, %21, %cst_17 [1] : vector<128x128xf32> to vector<128xf32>
    %23 = vector.shape_cast %22 : vector<128xf32> to vector<128x1xf32>
    %24 = vector.broadcast %23 : vector<128x1xf32> to vector<128x128xf32>
    %25 = arith.subf %21, %24 : vector<128x128xf32>
    %26 = math.exp %25 : vector<128x128xf32>
    %cst_18 = arith.constant dense<0.000000e+00> : vector<128xf32>
    %27 = vector.multi_reduction <add>, %26, %cst_18 [1] : vector<128x128xf32> to vector<128xf32>
    %28 = vector.shape_cast %27 : vector<128xf32> to vector<128x1xf32>
    %29 = tpu.reciprocal %28 {approx = true} : vector<128x1xf32> -> vector<128x1xf32>
    %30 = vector.broadcast %29 : vector<128x1xf32> to vector<128x128xf32>
    %31 = arith.mulf %26, %30 : vector<128x128xf32>
    %c0_19 = arith.constant 0 : index
    %c0_20 = arith.constant 0 : index
    %32 = vector.load %arg8[%c0_19, %c0_20] : memref<128x128xf32, #tpu.memory_space<vmem>>, vector<128x128xf32>
    tpu.vector_store %arg8[%c0_19, %c0_20], %31 {strides = array<i32>} : memref<128x128xf32, #tpu.memory_space<vmem>>, vector<128x128xf32>,
    return
  }
  func.func @transform_0(%arg0: i32) -> (i32, i32) {
    %c0_i32 = arith.constant 0 : i32
    %c0_i32_0 = arith.constant 0 : i32
    return %arg0, %c0_i32 : i32, i32
  }
  func.func @transform_1(%arg0: i32) -> (i32, i32) {
    %c0_i32 = arith.constant 0 : i32
    %c0_i32_0 = arith.constant 0 : i32
    %c0_i32_1 = arith.constant 0 : i32
    return %c0_i32, %c0_i32_0 : i32, i32
  }
  func.func @transform_2(%arg0: i32) -> (i32, i32) {
    %c0_i32 = arith.constant 0 : i32
    %c0_i32_0 = arith.constant 0 : i32
    %c0_i32_1 = arith.constant 0 : i32
    return %c0_i32, %c0_i32_0 : i32, i32
  }
  func.func @transform_3(%arg0: i32) -> (i32, i32) {
    %c0_i32 = arith.constant 0 : i32
    %c0_i32_0 = arith.constant 0 : i32
    %c0_i32_1 = arith.constant 0 : i32
    return %c0_i32, %c0_i32_0 : i32, i32
  }
  func.func @transform_4(%arg0: i32) -> (i32, i32) {
    %c0_i32 = arith.constant 0 : i32
    %c0_i32_0 = arith.constant 0 : i32
    %c0_i32_1 = arith.constant 0 : i32
    return %c0_i32, %c0_i32_0 : i32, i32
  }
  func.func @transform_5(%arg0: i32) -> (i32, i32) {
    %c0_i32 = arith.constant 0 : i32
    %c0_i32_0 = arith.constant 0 : i32
    %c0_i32_1 = arith.constant 0 : i32
    return %c0_i32, %c0_i32_0 : i32, i32
  }
  func.func @transform_6(%arg0: i32) -> (i32, i32) {
    %c0_i32 = arith.constant 0 : i32
    %c0_i32_0 = arith.constant 0 : i32
    %c0_i32_1 = arith.constant 0 : i32
    return %c0_i32, %c0_i32_0 : i32, i32
  }
  func.func @transform_7(%arg0: i32) -> (i32, i32) {
    %c0_i32 = arith.constant 0 : i32
    %c0_i32_0 = arith.constant 0 : i32
    return %arg0, %c0_i32 : i32, i32
  }
}

</mosaic_0001>

<llo_original>
// kernel: tpu_custom_call.1
$region0: #{tpu_custom_call.1}
  #allocation0 [shape = 'u32[]', space=smem, size = 0x4, offset = 0x4, fixed_abs, tag = 'smem constant byte address 0x4 - core index']
  #allocation1 [shape = 'u32[72,128]{1,0:T(1,128)}', space=vmem, size = 0x9000, scoped, tag = 'internal scratch']
  %s0 = inlined_call_operand.hbm [shape: bf16[128,128], index: 0, kind: input, shape index: {}]
  %s1 = inlined_call_operand.hbm [shape: bf16[128,512], index: 1, kind: input, shape index: {}]
  %s2 = inlined_call_operand.hbm [shape: f32[1,512], index: 2, kind: input, shape index: {}]
  %s3 = inlined_call_operand.hbm [shape: bf16[512,512], index: 3, kind: input, shape index: {}]
  %s4 = inlined_call_operand.hbm [shape: f32[1,512], index: 4, kind: input, shape index: {}]
  %s5 = inlined_call_operand.hbm [shape: bf16[512,128], index: 5, kind: input, shape index: {}]
  %s6 = inlined_call_operand.vmem [shape: f32[1,128], index: 6, kind: input, shape index: {}]
  %s7 = inlined_call_operand.hbm [shape: f32[128,128], index: 7, kind: output, shape index: {}]
  %s8 = sld [smem:[#allocation0]]
  $region62: #{tpu_custom_call.1} parent=0
    _
  %s10 = ssub.s32 1, %s8
  %s11 = scalar_select 0, %s10, %s8
  $region1: #{tpu_custom_call.1} parent=0
    #allocation2 [shape = 'u8[32768]{0}', space=vmem, size = 0x8000, scoped, tag = 'input window, operand 0, single buffered']
    #allocation3 [shape = 's32[1]{0}', space=sflag, size = 0x4, scoped, tag = 'scoped memory for tpu_custom_call.1']
    #allocation4 [shape = 's32[1]{0}', space=sflag, size = 0x4, scoped, tag = 'scoped memory for tpu_custom_call.1']
    #allocation5 [shape = 'u8[131072]{0}', space=vmem, size = 0x20000, scoped, tag = 'input window, operand 1, single buffered']
    #allocation6 [shape = 's32[1]{0}', space=sflag, size = 0x4, scoped, tag = 'scoped memory for tpu_custom_call.1']
    #allocation7 [shape = 'u8[2048]{0}', space=vmem, size = 0x800, scoped, tag = 'input window, operand 2, single buffered']
    #allocation8 [shape = 'u8[524288]{0}', space=vmem, size = 0x80000, scoped, tag = 'input window, operand 3, single buffered']
    #allocation9 [shape = 's32[1]{0}', space=sflag, size = 0x4, scoped, tag = 'scoped memory for tpu_custom_call.1']
    #allocation10 [shape = 'u8[2048]{0}', space=vmem, size = 0x800, scoped, tag = 'input window, operand 4, single buffered']
    #allocation11 [shape = 'u8[131072]{0}', space=vmem, size = 0x20000, scoped, tag = 'input window, operand 5, single buffered']
    #allocation12 [shape = 's32[1]{0}', space=sflag, size = 0x4, scoped, tag = 'scoped memory for tpu_custom_call.1']
    #allocation13 [shape = 'u8[65536]{0}', space=vmem, size = 0x10000, scoped, tag = 'output window, operand 0, single buffered']
    %12 = vsyncpa [#allocation3], 0
    %13 = vsyncpa [#allocation6], 0
    %14 = vsyncpa [#allocation9], 0
    %15 = vsyncpa [#allocation12], 0
    %16 = vsyncpa [#allocation4], 0
    // Predicated region
    $region2: #{tpu_custom_call.1} parent=1 // pred_check
      _
    $region3: #{tpu_custom_call.1} parent=1 // pred_check_branch
      %18 = sbr.rel (0) target = $region5
    $region4: #{tpu_custom_call.1} parent=1 // pred_region
      %20 = vsyncadd [#allocation3], 0
      %s21 = sshll.u32 %s0, 4
      %s22 = int_to_ptr.hbm [resolvable:$true] %s21
      %s23 = sshll.u32 [#allocation2], 4
      %s24 = int_to_ptr.vmem [resolvable:$true] %s23
      %29 = dma.hbm_to_vmem [thread:$0]  %s22, 1024, %s24, [#allocation3], 64, 64, 4
    $region5: #{tpu_custom_call.1} parent=1 // pred_fallthru
      _
    // Predicated region
    $region6: #{tpu_custom_call.1} parent=1 // pred_check
      _
    $region7: #{tpu_custom_call.1} parent=1 // pred_check_branch
      %31 = sbr.rel (0) target = $region9
    $region8: #{tpu_custom_call.1} parent=1 // pred_region
      %33 = vsyncadd [#allocation6], 0
      %s34 = sshll.u32 %s1, 4
      %s35 = int_to_ptr.hbm [resolvable:$true] %s34
      %s36 = sshll.u32 [#allocation5], 4
      %s37 = int_to_ptr.vmem [resolvable:$true] %s36
      %42 = dma.hbm_to_vmem [thread:$0]  %s35, 4096, %s37, [#allocation6], 256, 256, 16
    $region9: #{tpu_custom_call.1} parent=1 // pred_fallthru
      _
    // Predicated region
    $region10: #{tpu_custom_call.1} parent=1 // pred_check
      _
    $region11: #{tpu_custom_call.1} parent=1 // pred_check_branch
      %44 = sbr.rel (0) target = $region13
    $region12: #{tpu_custom_call.1} parent=1 // pred_region
      %46 = vsyncadd [#allocation6], 0
      %s48 = sshll.u32 %s2, 4
      %s49 = int_to_ptr.hbm [resolvable:$true] %s48
      %s50 = sshll.u32 [#allocation7], 4
      %s51 = int_to_ptr.vmem [resolvable:$true] %s50
      %53 = dma.hbm_to_vmem [thread:$0]  %s49, 64, %s51, [#allocation6]
    $region13: #{tpu_custom_call.1} parent=1 // pred_fallthru
      _
    // Predicated region
    $region14: #{tpu_custom_call.1} parent=1 // pred_check
      _
    $region15: #{tpu_custom_call.1} parent=1 // pred_check_branch
      %55 = sbr.rel (0) target = $region17
    $region16: #{tpu_custom_call.1} parent=1 // pred_region
      %57 = vsyncadd [#allocation9], 0
      %s58 = sshll.u32 %s3, 4
      %s59 = int_to_ptr.hbm [resolvable:$true] %s58
      %s60 = sshll.u32 [#allocation8], 4
      %s61 = int_to_ptr.vmem [resolvable:$true] %s60
      %66 = dma.hbm_to_vmem [thread:$0]  %s59, 16384, %s61, [#allocation9], 256, 256, 16
    $region17: #{tpu_custom_call.1} parent=1 // pred_fallthru
      _
    // Predicated region
    $region18: #{tpu_custom_call.1} parent=1 // pred_check
      _
    $region19: #{tpu_custom_call.1} parent=1 // pred_check_branch
      %68 = sbr.rel (0) target = $region21
    $region20: #{tpu_custom_call.1} parent=1 // pred_region
      %70 = vsyncadd [#allocation9], 0
      %s72 = sshll.u32 %s4, 4
      %s73 = int_to_ptr.hbm [resolvable:$true] %s72
      %s74 = sshll.u32 [#allocation10], 4
      %s75 = int_to_ptr.vmem [resolvable:$true] %s74
      %77 = dma.hbm_to_vmem [thread:$0]  %s73, 64, %s75, [#allocation9]
    $region21: #{tpu_custom_call.1} parent=1 // pred_fallthru
      _
    // Predicated region
    $region22: #{tpu_custom_call.1} parent=1 // pred_check
      _
    $region23: #{tpu_custom_call.1} parent=1 // pred_check_branch
      %79 = sbr.rel (0) target = $region25
    $region24: #{tpu_custom_call.1} parent=1 // pred_region
      %81 = vsyncadd [#allocation12], 0
      %s82 = sshll.u32 %s5, 4
      %s83 = int_to_ptr.hbm [resolvable:$true] %s82
      %s84 = sshll.u32 [#allocation11], 4
      %s85 = int_to_ptr.vmem [resolvable:$true] %s84
      %90 = dma.hbm_to_vmem [thread:$0]  %s83, 4096, %s85, [#allocation12], 64, 64, 4
    $region25: #{tpu_custom_call.1} parent=1 // pred_fallthru
      _
    // Predicated region
    $region26: #{tpu_custom_call.1} parent=1 // pred_check
      _
    $region27: #{tpu_custom_call.1} parent=1 // pred_check_branch
      %92 = sbr.rel (0) target = $region29
    $region28: #{tpu_custom_call.1} parent=1 // pred_region
      _
    $region29: #{tpu_custom_call.1} parent=1 // pred_fallthru
      _
    // Predicated region
    $region30: #{tpu_custom_call.1} parent=1 // pred_check
      _
    $region31: #{tpu_custom_call.1} parent=1 // pred_check_branch
      %94 = sbr.rel (0) target = $region33
    $region32: #{tpu_custom_call.1} parent=1 // pred_region
      %96 = dma.done [#allocation3], 1024
    $region33: #{tpu_custom_call.1} parent=1 // pred_fallthru
      _
    // Predicated region
    $region34: #{tpu_custom_call.1} parent=1 // pred_check
      _
    $region35: #{tpu_custom_call.1} parent=1 // pred_check_branch
      %98 = sbr.rel (0) target = $region37
    $region36: #{tpu_custom_call.1} parent=1 // pred_region
      %100 = dma.done [#allocation6], 4096
    $region37: #{tpu_custom_call.1} parent=1 // pred_fallthru
      _
    // Predicated region
    $region38: #{tpu_custom_call.1} parent=1 // pred_check
      _
    $region39: #{tpu_custom_call.1} parent=1 // pred_check_branch
      %102 = sbr.rel (0) target = $region41
    $region40: #{tpu_custom_call.1} parent=1 // pred_region
      %104 = dma.done [#allocation6], 64
    $region41: #{tpu_custom_call.1} parent=1 // pred_fallthru
      _
    // Predicated region
    $region42: #{tpu_custom_call.1} parent=1 // pred_check
      _
    $region43: #{tpu_custom_call.1} parent=1 // pred_check_branch
      %106 = sbr.rel (0) target = $region45
    $region44: #{tpu_custom_call.1} parent=1 // pred_region
      %108 = dma.done [#allocation9], 16384
    $region45: #{tpu_custom_call.1} parent=1 // pred_fallthru
      _
    // Predicated region
    $region46: #{tpu_custom_call.1} parent=1 // pred_check
      _
    $region47: #{tpu_custom_call.1} parent=1 // pred_check_branch
      %110 = sbr.rel (0) target = $region49
    $region48: #{tpu_custom_call.1} parent=1 // pred_region
      %112 = dma.done [#allocation9], 64
    $region49: #{tpu_custom_call.1} parent=1 // pred_fallthru
      _
    // Predicated region
    $region50: #{tpu_custom_call.1} parent=1 // pred_check
      _
    $region51: #{tpu_custom_call.1} parent=1 // pred_check_branch
      %114 = sbr.rel (0) target = $region53
    $region52: #{tpu_custom_call.1} parent=1 // pred_region
      %116 = dma.done [#allocation12], 4096
    $region53: #{tpu_custom_call.1} parent=1 // pred_fallthru
      _
    %v117 = vld [vmem:[#allocation2] sm:$0xf]
    %v118 = vld [vmem:[#allocation2 + $0x4] sm:$0xf]
    %v119 = vld [vmem:[#allocation2 + $0x8] sm:$0xf]
    %v120 = vld [vmem:[#allocation2 + $0xc] sm:$0xf]
    %v121 = vld [vmem:[#allocation2 + $0x10] sm:$0xf]
    %v122 = vld [vmem:[#allocation2 + $0x14] sm:$0xf]
    %v123 = vld [vmem:[#allocation2 + $0x18] sm:$0xf]
    %v124 = vld [vmem:[#allocation2 + $0x1c] sm:$0xf]
    %v125 = vld [vmem:[#allocation2 + $0x20] sm:$0xf]
    %v126 = vld [vmem:[#allocation2 + $0x24] sm:$0xf]
    %v127 = vld [vmem:[#allocation2 + $0x28] sm:$0xf]
    %v128 = vld [vmem:[#allocation2 + $0x2c] sm:$0xf]
    %v129 = vld [vmem:[#allocation2 + $0x30] sm:$0xf]
    %v130 = vld [vmem:[#allocation2 + $0x34] sm:$0xf]
    %v131 = vld [vmem:[#allocation2 + $0x38] sm:$0xf]
    %v132 = vld [vmem:[#allocation2 + $0x3c] sm:$0xf]
    %v133 = vld [vmem:[#allocation5] sm:$0xff]
    %v134 = vld [vmem:[#allocation5 + $0x8] sm:$0xff]
    %v135 = vld [vmem:[#allocation5 + $0x10] sm:$0xff]
    %v136 = vld [vmem:[#allocation5 + $0x18] sm:$0xff]
    %v137 = vld [vmem:[#allocation5 + $0x20] sm:$0xff]
    %v138 = vld [vmem:[#allocation5 + $0x28] sm:$0xff]
    %v139 = vld [vmem:[#allocation5 + $0x30] sm:$0xff]
    %v140 = vld [vmem:[#allocation5 + $0x38] sm:$0xff]
    %v141 = vld [vmem:[#allocation5 + $0x40] sm:$0xff]
    %v142 = vld [vmem:[#allocation5 + $0x48] sm:$0xff]
    %v143 = vld [vmem:[#allocation5 + $0x50] sm:$0xff]
    %v144 = vld [vmem:[#allocation5 + $0x58] sm:$0xff]
    %v145 = vld [vmem:[#allocation5 + $0x60] sm:$0xff]
    %v146 = vld [vmem:[#allocation5 + $0x68] sm:$0xff]
    %v147 = vld [vmem:[#allocation5 + $0x70] sm:$0xff]
    %v148 = vld [vmem:[#allocation5 + $0x78] sm:$0xff]
    %v149 = vld [vmem:[#allocation5 + $0x80] sm:$0xff]
    %v150 = vld [vmem:[#allocation5 + $0x88] sm:$0xff]
    %v151 = vld [vmem:[#allocation5 + $0x90] sm:$0xff]
    %v152 = vld [vmem:[#allocation5 + $0x98] sm:$0xff]
    %v153 = vld [vmem:[#allocation5 + $0xa0] sm:$0xff]
    %v154 = vld [vmem:[#allocation5 + $0xa8] sm:$0xff]
    %v155 = vld [vmem:[#allocation5 + $0xb0] sm:$0xff]
    %v156 = vld [vmem:[#allocation5 + $0xb8] sm:$0xff]
    %v157 = vld [vmem:[#allocation5 + $0xc0] sm:$0xff]
    %v158 = vld [vmem:[#allocation5 + $0xc8] sm:$0xff]
    %v159 = vld [vmem:[#allocation5 + $0xd0] sm:$0xff]
    %v160 = vld [vmem:[#allocation5 + $0xd8] sm:$0xff]
    %v161 = vld [vmem:[#allocation5 + $0xe0] sm:$0xff]
    %v162 = vld [vmem:[#allocation5 + $0xe8] sm:$0xff]
    %v163 = vld [vmem:[#allocation5 + $0xf0] sm:$0xff]
    %v164 = vld [vmem:[#allocation5 + $0xf8] sm:$0xff]
    %v165 = vld [vmem:[#allocation7] sm:$0xf]
    %v167 = vperm.slane %v165, 0
    %v168 = vperm.slane %v165, 1
    %v169 = vperm.slane %v165, 2
    %v170 = vperm.slane %v165, 3
    %v191 = vunpack.c.l.b16 %v117
    %v192 = vunpack.c.l.b16 %v118
    %v193 = vunpack.c.l.b16 %v119
    %v194 = vunpack.c.l.b16 %v120
    %v195 = vunpack.c.l.b16 %v121
    %v196 = vunpack.c.l.b16 %v122
    %v197 = vunpack.c.l.b16 %v123
    %v198 = vunpack.c.l.b16 %v124
    %v199 = vunpack.c.l.b16 %v125
    %v200 = vunpack.c.l.b16 %v126
    %v201 = vunpack.c.l.b16 %v127
    %v202 = vunpack.c.l.b16 %v128
    %v203 = vunpack.c.l.b16 %v129
    %v204 = vunpack.c.l.b16 %v130
    %v205 = vunpack.c.l.b16 %v131
    %v206 = vunpack.c.l.b16 %v132
    %v207 = vpack.c.b16 %v192, %v191
    %v208 = vpack.c.b16 %v194, %v193
    %v209 = vpack.c.b16 %v196, %v195
    %v210 = vpack.c.b16 %v198, %v197
    %v211 = vpack.c.b16 %v200, %v199
    %v212 = vpack.c.b16 %v202, %v201
    %v213 = vpack.c.b16 %v204, %v203
    %v214 = vpack.c.b16 %v206, %v205
    %v255 = vunpack.c.l.b16 %v133
    %v256 = vunpack.c.h.b16 %v133
    %v257 = vunpack.c.l.b16 %v134
    %v258 = vunpack.c.h.b16 %v134
    %v259 = vunpack.c.l.b16 %v135
    %v260 = vunpack.c.h.b16 %v135
    %v261 = vunpack.c.l.b16 %v136
    %v262 = vunpack.c.h.b16 %v136
    %v263 = vunpack.c.l.b16 %v137
    %v264 = vunpack.c.h.b16 %v137
    %v265 = vunpack.c.l.b16 %v138
    %v266 = vunpack.c.h.b16 %v138
    %v267 = vunpack.c.l.b16 %v139
    %v268 = vunpack.c.h.b16 %v139
    %v269 = vunpack.c.l.b16 %v140
    %v270 = vunpack.c.h.b16 %v140
    %v271 = vunpack.c.l.b16 %v141
    %v272 = vunpack.c.h.b16 %v141
    %v273 = vunpack.c.l.b16 %v142
    %v274 = vunpack.c.h.b16 %v142
    %v275 = vunpack.c.l.b16 %v143
    %v276 = vunpack.c.h.b16 %v143
    %v277 = vunpack.c.l.b16 %v144
    %v278 = vunpack.c.h.b16 %v144
    %v279 = vunpack.c.l.b16 %v145
    %v280 = vunpack.c.h.b16 %v145
    %v281 = vunpack.c.l.b16 %v146
    %v282 = vunpack.c.h.b16 %v146
    %v283 = vunpack.c.l.b16 %v147
    %v284 = vunpack.c.h.b16 %v147
    %v285 = vunpack.c.l.b16 %v148
    %v286 = vunpack.c.h.b16 %v148
    %v287 = vunpack.c.l.b16 %v149
    %v288 = vunpack.c.h.b16 %v149
    %v289 = vunpack.c.l.b16 %v150
    %v290 = vunpack.c.h.b16 %v150
    %v291 = vunpack.c.l.b16 %v151
    %v292 = vunpack.c.h.b16 %v151
    %v293 = vunpack.c.l.b16 %v152
    %v294 = vunpack.c.h.b16 %v152
    %v295 = vunpack.c.l.b16 %v153
    %v296 = vunpack.c.h.b16 %v153
    %v297 = vunpack.c.l.b16 %v154
    %v298 = vunpack.c.h.b16 %v154
    %v299 = vunpack.c.l.b16 %v155
    %v300 = vunpack.c.h.b16 %v155
    %v301 = vunpack.c.l.b16 %v156
    %v302 = vunpack.c.h.b16 %v156
    %v303 = vunpack.c.l.b16 %v157
    %v304 = vunpack.c.h.b16 %v157
    %v305 = vunpack.c.l.b16 %v158
    %v306 = vunpack.c.h.b16 %v158
    %v307 = vunpack.c.l.b16 %v159
    %v308 = vunpack.c.h.b16 %v159
    %v309 = vunpack.c.l.b16 %v160
    %v310 = vunpack.c.h.b16 %v160
    %v311 = vunpack.c.l.b16 %v161
    %v312 = vunpack.c.h.b16 %v161
    %v313 = vunpack.c.l.b16 %v162
    %v314 = vunpack.c.h.b16 %v162
    %v315 = vunpack.c.l.b16 %v163
    %v316 = vunpack.c.h.b16 %v163
    %v317 = vunpack.c.l.b16 %v164
    %v318 = vunpack.c.h.b16 %v164
    %v319 = vpack.c.b16 %v259, %v255
    %v320 = vpack.c.b16 %v260, %v256
    %v321 = vpack.c.b16 %v261, %v257
    %v322 = vpack.c.b16 %v262, %v258
    %v323 = vpack.c.b16 %v267, %v263
    %v324 = vpack.c.b16 %v268, %v264
    %v325 = vpack.c.b16 %v269, %v265
    %v326 = vpack.c.b16 %v270, %v266
    %v327 = vpack.c.b16 %v275, %v271
    %v328 = vpack.c.b16 %v276, %v272
    %v329 = vpack.c.b16 %v277, %v273
    %v330 = vpack.c.b16 %v278, %v274
    %v331 = vpack.c.b16 %v283, %v279
    %v332 = vpack.c.b16 %v284, %v280
    %v333 = vpack.c.b16 %v285, %v281
    %v334 = vpack.c.b16 %v286, %v282
    %v335 = vpack.c.b16 %v291, %v287
    %v336 = vpack.c.b16 %v292, %v288
    %v337 = vpack.c.b16 %v293, %v289
    %v338 = vpack.c.b16 %v294, %v290
    %v339 = vpack.c.b16 %v299, %v295
    %v340 = vpack.c.b16 %v300, %v296
    %v341 = vpack.c.b16 %v301, %v297
    %v342 = vpack.c.b16 %v302, %v298
    %v343 = vpack.c.b16 %v307, %v303
    %v344 = vpack.c.b16 %v308, %v304
    %v345 = vpack.c.b16 %v309, %v305
    %v346 = vpack.c.b16 %v310, %v306
    %v347 = vpack.c.b16 %v315, %v311
    %v348 = vpack.c.b16 %v316, %v312
    %v349 = vpack.c.b16 %v317, %v313
    %v350 = vpack.c.b16 %v318, %v314
    %383 = vmatpush.bf16.msra.mxu0 %v347
    %384 = vmatpush.bf16.msra.mxu0 %v343
    %385 = vmatpush.bf16.msra.mxu0 %v339
    %386 = vmatpush.bf16.msra.mxu0 %v335
    %387 = vmatpush.bf16.msra.mxu0 %v331
    %388 = vmatpush.bf16.msra.mxu0 %v327
    %389 = vmatpush.bf16.msra.mxu0 %v323
    %390 = vmatpush.bf16.msra.mxu0 %v319
    %391 = vmatmul.bf16.gmra.mxu0 %v207
    %v392 = vpop.f32.mrf.mxu0
    %v393 = vadd.f32 %v167, %v392
    %v394 = vpop.f32.mrf.mxu0
    %v395 = vadd.f32 %v167, %v394
    %396 = vmatmul.bf16.gmra.mxu0 %v208
    %v397 = vpop.f32.mrf.mxu0
    %v398 = vadd.f32 %v167, %v397
    %v399 = vpop.f32.mrf.mxu0
    %v400 = vadd.f32 %v167, %v399
    %401 = vmatmul.bf16.gmra.mxu0 %v209
    %v402 = vpop.f32.mrf.mxu0
    %v403 = vadd.f32 %v167, %v402
    %v404 = vpop.f32.mrf.mxu0
    %v405 = vadd.f32 %v167, %v404
    %406 = vmatmul.bf16.gmra.mxu0 %v210
    %v407 = vpop.f32.mrf.mxu0
    %v408 = vadd.f32 %v167, %v407
    %v409 = vpop.f32.mrf.mxu0
    %v410 = vadd.f32 %v167, %v409
    %411 = vmatmul.bf16.gmra.mxu0 %v211
    %v412 = vpop.f32.mrf.mxu0
    %v413 = vadd.f32 %v167, %v412
    %v414 = vpop.f32.mrf.mxu0
    %v415 = vadd.f32 %v167, %v414
    %416 = vmatmul.bf16.gmra.mxu0 %v212
    %v417 = vpop.f32.mrf.mxu0
    %v418 = vadd.f32 %v167, %v417
    %v419 = vpop.f32.mrf.mxu0
    %v420 = vadd.f32 %v167, %v419
    %421 = vmatmul.bf16.gmra.mxu0 %v213
    %v422 = vpop.f32.mrf.mxu0
    %v423 = vadd.f32 %v167, %v422
    %v424 = vpop.f32.mrf.mxu0
    %v425 = vadd.f32 %v167, %v424
    %426 = vmatmul.bf16.gmra.mxu0 %v214
    %v427 = vpop.f32.mrf.mxu0
    %v428 = vadd.f32 %v167, %v427
    %v429 = vpop.f32.mrf.mxu0
    %v430 = vadd.f32 %v167, %v429
    %431 = vdwg.mxu0
    %432 = vmatpush.bf16.msra.mxu0 %v348
    %433 = vmatpush.bf16.msra.mxu0 %v344
    %434 = vmatpush.bf16.msra.mxu0 %v340
    %435 = vmatpush.bf16.msra.mxu0 %v336
    %436 = vmatpush.bf16.msra.mxu0 %v332
    %437 = vmatpush.bf16.msra.mxu0 %v328
    %438 = vmatpush.bf16.msra.mxu0 %v324
    %439 = vmatpush.bf16.msra.mxu0 %v320
    %440 = vmatmul.bf16.gmra.mxu0 %v207
    %v441 = vpop.f32.mrf.mxu0
    %v442 = vadd.f32 %v168, %v441
    %v443 = vpop.f32.mrf.mxu0
    %v444 = vadd.f32 %v168, %v443
    %445 = vmatmul.bf16.gmra.mxu0 %v208
    %v446 = vpop.f32.mrf.mxu0
    %v447 = vadd.f32 %v168, %v446
    %v448 = vpop.f32.mrf.mxu0
    %v449 = vadd.f32 %v168, %v448
    %450 = vmatmul.bf16.gmra.mxu0 %v209
    %v451 = vpop.f32.mrf.mxu0
    %v452 = vadd.f32 %v168, %v451
    %v453 = vpop.f32.mrf.mxu0
    %v454 = vadd.f32 %v168, %v453
    %455 = vmatmul.bf16.gmra.mxu0 %v210
    %v456 = vpop.f32.mrf.mxu0
    %v457 = vadd.f32 %v168, %v456
    %v458 = vpop.f32.mrf.mxu0
    %v459 = vadd.f32 %v168, %v458
    %460 = vmatmul.bf16.gmra.mxu0 %v211
    %v461 = vpop.f32.mrf.mxu0
    %v462 = vadd.f32 %v168, %v461
    %v463 = vpop.f32.mrf.mxu0
    %v464 = vadd.f32 %v168, %v463
    %465 = vmatmul.bf16.gmra.mxu0 %v212
    %v466 = vpop.f32.mrf.mxu0
    %v467 = vadd.f32 %v168, %v466
    %v468 = vpop.f32.mrf.mxu0
    %v469 = vadd.f32 %v168, %v468
    %470 = vmatmul.bf16.gmra.mxu0 %v213
    %v471 = vpop.f32.mrf.mxu0
    %v472 = vadd.f32 %v168, %v471
    %v473 = vpop.f32.mrf.mxu0
    %v474 = vadd.f32 %v168, %v473
    %475 = vmatmul.bf16.gmra.mxu0 %v214
    %v476 = vpop.f32.mrf.mxu0
    %v477 = vadd.f32 %v168, %v476
    %v478 = vpop.f32.mrf.mxu0
    %v479 = vadd.f32 %v168, %v478
    %480 = vdwg.mxu0
    %481 = vmatpush.bf16.msra.mxu0 %v349
    %482 = vmatpush.bf16.msra.mxu0 %v345
    %483 = vmatpush.bf16.msra.mxu0 %v341
    %484 = vmatpush.bf16.msra.mxu0 %v337
    %485 = vmatpush.bf16.msra.mxu0 %v333
    %486 = vmatpush.bf16.msra.mxu0 %v329
    %487 = vmatpush.bf16.msra.mxu0 %v325
    %488 = vmatpush.bf16.msra.mxu0 %v321
    %489 = vmatmul.bf16.gmra.mxu0 %v207
    %v490 = vpop.f32.mrf.mxu0
    %v491 = vadd.f32 %v169, %v490
    %v492 = vpop.f32.mrf.mxu0
    %v493 = vadd.f32 %v169, %v492
    %494 = vmatmul.bf16.gmra.mxu0 %v208
    %v495 = vpop.f32.mrf.mxu0
    %v496 = vadd.f32 %v169, %v495
    %v497 = vpop.f32.mrf.mxu0
    %v498 = vadd.f32 %v169, %v497
    %499 = vmatmul.bf16.gmra.mxu0 %v209
    %v500 = vpop.f32.mrf.mxu0
    %v501 = vadd.f32 %v169, %v500
    %v502 = vpop.f32.mrf.mxu0
    %v503 = vadd.f32 %v169, %v502
    %504 = vmatmul.bf16.gmra.mxu0 %v210
    %v505 = vpop.f32.mrf.mxu0
    %v506 = vadd.f32 %v169, %v505
    %v507 = vpop.f32.mrf.mxu0
    %v508 = vadd.f32 %v169, %v507
    %509 = vmatmul.bf16.gmra.mxu0 %v211
    %v510 = vpop.f32.mrf.mxu0
    %v511 = vadd.f32 %v169, %v510
    %v512 = vpop.f32.mrf.mxu0
    %v513 = vadd.f32 %v169, %v512
    %514 = vmatmul.bf16.gmra.mxu0 %v212
    %v515 = vpop.f32.mrf.mxu0
    %v516 = vadd.f32 %v169, %v515
    %v517 = vpop.f32.mrf.mxu0
    %v518 = vadd.f32 %v169, %v517
    %519 = vmatmul.bf16.gmra.mxu0 %v213
    %v520 = vpop.f32.mrf.mxu0
    %v521 = vadd.f32 %v169, %v520
    %v522 = vpop.f32.mrf.mxu0
    %v523 = vadd.f32 %v169, %v522
    %524 = vmatmul.bf16.gmra.mxu0 %v214
    %v525 = vpop.f32.mrf.mxu0
    %v526 = vadd.f32 %v169, %v525
    %v527 = vpop.f32.mrf.mxu0
    %v528 = vadd.f32 %v169, %v527
    %529 = vdwg.mxu0
    %530 = vmatpush.bf16.msra.mxu0 %v350
    %531 = vmatpush.bf16.msra.mxu0 %v346
    %532 = vmatpush.bf16.msra.mxu0 %v342
    %533 = vmatpush.bf16.msra.mxu0 %v338
    %534 = vmatpush.bf16.msra.mxu0 %v334
    %535 = vmatpush.bf16.msra.mxu0 %v330
    %536 = vmatpush.bf16.msra.mxu0 %v326
    %537 = vmatpush.bf16.msra.mxu0 %v322
    %538 = vmatmul.bf16.gmra.mxu0 %v207
    %v539 = vpop.f32.mrf.mxu0
    %v540 = vadd.f32 %v170, %v539
    %v541 = vpop.f32.mrf.mxu0
    %v542 = vadd.f32 %v170, %v541
    %543 = vmatmul.bf16.gmra.mxu0 %v208
    %v544 = vpop.f32.mrf.mxu0
    %v545 = vadd.f32 %v170, %v544
    %v546 = vpop.f32.mrf.mxu0
    %v547 = vadd.f32 %v170, %v546
    %548 = vmatmul.bf16.gmra.mxu0 %v209
    %v549 = vpop.f32.mrf.mxu0
    %v550 = vadd.f32 %v170, %v549
    %v551 = vpop.f32.mrf.mxu0
    %v552 = vadd.f32 %v170, %v551
    %553 = vmatmul.bf16.gmra.mxu0 %v210
    %v554 = vpop.f32.mrf.mxu0
    %v555 = vadd.f32 %v170, %v554
    %v556 = vpop.f32.mrf.mxu0
    %v557 = vadd.f32 %v170, %v556
    %558 = vmatmul.bf16.gmra.mxu0 %v211
    %v559 = vpop.f32.mrf.mxu0
    %v560 = vadd.f32 %v170, %v559
    %v561 = vpop.f32.mrf.mxu0
    %v562 = vadd.f32 %v170, %v561
    %563 = vmatmul.bf16.gmra.mxu0 %v212
    %v564 = vpop.f32.mrf.mxu0
    %v565 = vadd.f32 %v170, %v564
    %v566 = vpop.f32.mrf.mxu0
    %v567 = vadd.f32 %v170, %v566
    %568 = vmatmul.bf16.gmra.mxu0 %v213
    %v569 = vpop.f32.mrf.mxu0
    %v570 = vadd.f32 %v170, %v569
    %v571 = vpop.f32.mrf.mxu0
    %v572 = vadd.f32 %v170, %v571
    %573 = vmatmul.bf16.gmra.mxu0 %v214
    %v574 = vpop.f32.mrf.mxu0
    %v575 = vadd.f32 %v170, %v574
    %v576 = vpop.f32.mrf.mxu0
    %v577 = vadd.f32 %v170, %v576
    %578 = vdwg.mxu0
    %v579 = vmax.f32 %v393, 0.0
    %v580 = vmax.f32 %v442, 0.0
    %v581 = vmax.f32 %v491, 0.0
    %v582 = vmax.f32 %v540, 0.0
    %v583 = vmax.f32 %v395, 0.0
    %v584 = vmax.f32 %v444, 0.0
    %v585 = vmax.f32 %v493, 0.0
    %v586 = vmax.f32 %v542, 0.0
    %v587 = vmax.f32 %v398, 0.0
    %v588 = vmax.f32 %v447, 0.0
    %v589 = vmax.f32 %v496, 0.0
    %v590 = vmax.f32 %v545, 0.0
    %v591 = vmax.f32 %v400, 0.0
    %v592 = vmax.f32 %v449, 0.0
    %v593 = vmax.f32 %v498, 0.0
    %v594 = vmax.f32 %v547, 0.0
    %v595 = vmax.f32 %v403, 0.0
    %v596 = vmax.f32 %v452, 0.0
    %v597 = vmax.f32 %v501, 0.0
    %v598 = vmax.f32 %v550, 0.0
    %v599 = vmax.f32 %v405, 0.0
    %v600 = vmax.f32 %v454, 0.0
    %v601 = vmax.f32 %v503, 0.0
    %v602 = vmax.f32 %v552, 0.0
    %v603 = vmax.f32 %v408, 0.0
    %v604 = vmax.f32 %v457, 0.0
    %v605 = vmax.f32 %v506, 0.0
    %v606 = vmax.f32 %v555, 0.0
    %v607 = vmax.f32 %v410, 0.0
    %v608 = vmax.f32 %v459, 0.0
    %v609 = vmax.f32 %v508, 0.0
    %v610 = vmax.f32 %v557, 0.0
    %v611 = vmax.f32 %v413, 0.0
    %v612 = vmax.f32 %v462, 0.0
    %v613 = vmax.f32 %v511, 0.0
    %v614 = vmax.f32 %v560, 0.0
    %v615 = vmax.f32 %v415, 0.0
    %v616 = vmax.f32 %v464, 0.0
    %v617 = vmax.f32 %v513, 0.0
    %v618 = vmax.f32 %v562, 0.0
    %v619 = vmax.f32 %v418, 0.0
    %v620 = vmax.f32 %v467, 0.0
    %v621 = vmax.f32 %v516, 0.0
    %v622 = vmax.f32 %v565, 0.0
    %v623 = vmax.f32 %v420, 0.0
    %v624 = vmax.f32 %v469, 0.0
    %v625 = vmax.f32 %v518, 0.0
    %v626 = vmax.f32 %v567, 0.0
    %v627 = vmax.f32 %v423, 0.0
    %v628 = vmax.f32 %v472, 0.0
    %v629 = vmax.f32 %v521, 0.0
    %v630 = vmax.f32 %v570, 0.0
    %v631 = vmax.f32 %v425, 0.0
    %v632 = vmax.f32 %v474, 0.0
    %v633 = vmax.f32 %v523, 0.0
    %v634 = vmax.f32 %v572, 0.0
    %v635 = vmax.f32 %v428, 0.0
    %v636 = vmax.f32 %v477, 0.0
    %v637 = vmax.f32 %v526, 0.0
    %v638 = vmax.f32 %v575, 0.0
    %v639 = vmax.f32 %v430, 0.0
    %v640 = vmax.f32 %v479, 0.0
    %v641 = vmax.f32 %v528, 0.0
    %v642 = vmax.f32 %v577, 0.0
    %v643 = vpack.c.bf16 %v583, %v579
    %v644 = vpack.c.bf16 %v584, %v580
    %v645 = vpack.c.bf16 %v585, %v581
    %v646 = vpack.c.bf16 %v586, %v582
    %v647 = vpack.c.bf16 %v591, %v587
    %v648 = vpack.c.bf16 %v592, %v588
    %v649 = vpack.c.bf16 %v593, %v589
    %v650 = vpack.c.bf16 %v594, %v590
    %v651 = vpack.c.bf16 %v599, %v595
    %v652 = vpack.c.bf16 %v600, %v596
    %v653 = vpack.c.bf16 %v601, %v597
    %v654 = vpack.c.bf16 %v602, %v598
    %v655 = vpack.c.bf16 %v607, %v603
    %v656 = vpack.c.bf16 %v608, %v604
    %v657 = vpack.c.bf16 %v609, %v605
    %v658 = vpack.c.bf16 %v610, %v606
    %v659 = vpack.c.bf16 %v615, %v611
    %v660 = vpack.c.bf16 %v616, %v612
    %v661 = vpack.c.bf16 %v617, %v613
    %v662 = vpack.c.bf16 %v618, %v614
    %v663 = vpack.c.bf16 %v623, %v619
    %v664 = vpack.c.bf16 %v624, %v620
    %v665 = vpack.c.bf16 %v625, %v621
    %v666 = vpack.c.bf16 %v626, %v622
    %v667 = vpack.c.bf16 %v631, %v627
    %v668 = vpack.c.bf16 %v632, %v628
    %v669 = vpack.c.bf16 %v633, %v629
    %v670 = vpack.c.bf16 %v634, %v630
    %v671 = vpack.c.bf16 %v639, %v635
    %v672 = vpack.c.bf16 %v640, %v636
    %v673 = vpack.c.bf16 %v641, %v637
    %v674 = vpack.c.bf16 %v642, %v638
    %v675 = vld [vmem:[#allocation8] sm:$0xff]
    %v676 = vld [vmem:[#allocation8 + $0x8] sm:$0xff]
    %v677 = vld [vmem:[#allocation8 + $0x10] sm:$0xff]
    %v678 = vld [vmem:[#allocation8 + $0x18] sm:$0xff]
    %v679 = vld [vmem:[#allocation8 + $0x20] sm:$0xff]
    %v680 = vld [vmem:[#allocation8 + $0x28] sm:$0xff]
    %v681 = vld [vmem:[#allocation8 + $0x30] sm:$0xff]
    %v682 = vld [vmem:[#allocation8 + $0x38] sm:$0xff]
    %v683 = vld [vmem:[#allocation8 + $0x40] sm:$0xff]
    %v684 = vld [vmem:[#allocation8 + $0x48] sm:$0xff]
    %v685 = vld [vmem:[#allocation8 + $0x50] sm:$0xff]
    %v686 = vld [vmem:[#allocation8 + $0x58] sm:$0xff]
    %v687 = vld [vmem:[#allocation8 + $0x60] sm:$0xff]
    %v688 = vld [vmem:[#allocation8 + $0x68] sm:$0xff]
    %v689 = vld [vmem:[#allocation8 + $0x70] sm:$0xff]
    %v690 = vld [vmem:[#allocation8 + $0x78] sm:$0xff]
    %v691 = vld [vmem:[#allocation8 + $0x80] sm:$0xff]
    %v692 = vld [vmem:[#allocation8 + $0x88] sm:$0xff]
    %v693 = vld [vmem:[#allocation8 + $0x90] sm:$0xff]
    %v694 = vld [vmem:[#allocation8 + $0x98] sm:$0xff]
    %v695 = vld [vmem:[#allocation8 + $0xa0] sm:$0xff]
    %v696 = vld [vmem:[#allocation8 + $0xa8] sm:$0xff]
    %v697 = vld [vmem:[#allocation8 + $0xb0] sm:$0xff]
    %v698 = vld [vmem:[#allocation8 + $0xb8] sm:$0xff]
    %v699 = vld [vmem:[#allocation8 + $0xc0] sm:$0xff]
    %v700 = vld [vmem:[#allocation8 + $0xc8] sm:$0xff]
    %v701 = vld [vmem:[#allocation8 + $0xd0] sm:$0xff]
    %v702 = vld [vmem:[#allocation8 + $0xd8] sm:$0xff]
    %v703 = vld [vmem:[#allocation8 + $0xe0] sm:$0xff]
    %v704 = vld [vmem:[#allocation8 + $0xe8] sm:$0xff]
    %v705 = vld [vmem:[#allocation8 + $0xf0] sm:$0xff]
    %v706 = vld [vmem:[#allocation8 + $0xf8] sm:$0xff]
    %v707 = vld [vmem:[#allocation8 + $0x100] sm:$0xff]
    %v708 = vld [vmem:[#allocation8 + $0x108] sm:$0xff]
    %v709 = vld [vmem:[#allocation8 + $0x110] sm:$0xff]
    %v710 = vld [vmem:[#allocation8 + $0x118] sm:$0xff]
    %v711 = vld [vmem:[#allocation8 + $0x120] sm:$0xff]
    %v712 = vld [vmem:[#allocation8 + $0x128] sm:$0xff]
    %v713 = vld [vmem:[#allocation8 + $0x130] sm:$0xff]
    %v714 = vld [vmem:[#allocation8 + $0x138] sm:$0xff]
    %v715 = vld [vmem:[#allocation8 + $0x140] sm:$0xff]
    %v716 = vld [vmem:[#allocation8 + $0x148] sm:$0xff]
    %v717 = vld [vmem:[#allocation8 + $0x150] sm:$0xff]
    %v718 = vld [vmem:[#allocation8 + $0x158] sm:$0xff]
    %v719 = vld [vmem:[#allocation8 + $0x160] sm:$0xff]
    %v720 = vld [vmem:[#allocation8 + $0x168] sm:$0xff]
    %v721 = vld [vmem:[#allocation8 + $0x170] sm:$0xff]
    %v722 = vld [vmem:[#allocation8 + $0x178] sm:$0xff]
    %v723 = vld [vmem:[#allocation8 + $0x180] sm:$0xff]
    %v724 = vld [vmem:[#allocation8 + $0x188] sm:$0xff]
    %v725 = vld [vmem:[#allocation8 + $0x190] sm:$0xff]
    %v726 = vld [vmem:[#allocation8 + $0x198] sm:$0xff]
    %v727 = vld [vmem:[#allocation8 + $0x1a0] sm:$0xff]
    %v728 = vld [vmem:[#allocation8 + $0x1a8] sm:$0xff]
    %v729 = vld [vmem:[#allocation8 + $0x1b0] sm:$0xff]
    %v730 = vld [vmem:[#allocation8 + $0x1b8] sm:$0xff]
    %v731 = vld [vmem:[#allocation8 + $0x1c0] sm:$0xff]
    %v732 = vld [vmem:[#allocation8 + $0x1c8] sm:$0xff]
    %v733 = vld [vmem:[#allocation8 + $0x1d0] sm:$0xff]
    %v734 = vld [vmem:[#allocation8 + $0x1d8] sm:$0xff]
    %v735 = vld [vmem:[#allocation8 + $0x1e0] sm:$0xff]
    %v736 = vld [vmem:[#allocation8 + $0x1e8] sm:$0xff]
    %v737 = vld [vmem:[#allocation8 + $0x1f0] sm:$0xff]
    %v738 = vld [vmem:[#allocation8 + $0x1f8] sm:$0xff]
    %v739 = vld [vmem:[#allocation8 + $0x200] sm:$0xff]
    %v740 = vld [vmem:[#allocation8 + $0x208] sm:$0xff]
    %v741 = vld [vmem:[#allocation8 + $0x210] sm:$0xff]
    %v742 = vld [vmem:[#allocation8 + $0x218] sm:$0xff]
    %v743 = vld [vmem:[#allocation8 + $0x220] sm:$0xff]
    %v744 = vld [vmem:[#allocation8 + $0x228] sm:$0xff]
    %v745 = vld [vmem:[#allocation8 + $0x230] sm:$0xff]
    %v746 = vld [vmem:[#allocation8 + $0x238] sm:$0xff]
    %v747 = vld [vmem:[#allocation8 + $0x240] sm:$0xff]
    %v748 = vld [vmem:[#allocation8 + $0x248] sm:$0xff]
    %v749 = vld [vmem:[#allocation8 + $0x250] sm:$0xff]
    %v750 = vld [vmem:[#allocation8 + $0x258] sm:$0xff]
    %v751 = vld [vmem:[#allocation8 + $0x260] sm:$0xff]
    %v752 = vld [vmem:[#allocation8 + $0x268] sm:$0xff]
    %v753 = vld [vmem:[#allocation8 + $0x270] sm:$0xff]
    %v754 = vld [vmem:[#allocation8 + $0x278] sm:$0xff]
    %v755 = vld [vmem:[#allocation8 + $0x280] sm:$0xff]
    %v756 = vld [vmem:[#allocation8 + $0x288] sm:$0xff]
    %v757 = vld [vmem:[#allocation8 + $0x290] sm:$0xff]
    %v758 = vld [vmem:[#allocation8 + $0x298] sm:$0xff]
    %v759 = vld [vmem:[#allocation8 + $0x2a0] sm:$0xff]
    %v760 = vld [vmem:[#allocation8 + $0x2a8] sm:$0xff]
    %v761 = vld [vmem:[#allocation8 + $0x2b0] sm:$0xff]
    %v762 = vld [vmem:[#allocation8 + $0x2b8] sm:$0xff]
    %v763 = vld [vmem:[#allocation8 + $0x2c0] sm:$0xff]
    %v764 = vld [vmem:[#allocation8 + $0x2c8] sm:$0xff]
    %v765 = vld [vmem:[#allocation8 + $0x2d0] sm:$0xff]
    %v766 = vld [vmem:[#allocation8 + $0x2d8] sm:$0xff]
    %v767 = vld [vmem:[#allocation8 + $0x2e0] sm:$0xff]
    %v768 = vld [vmem:[#allocation8 + $0x2e8] sm:$0xff]
    %v769 = vld [vmem:[#allocation8 + $0x2f0] sm:$0xff]
    %v770 = vld [vmem:[#allocation8 + $0x2f8] sm:$0xff]
    %v771 = vld [vmem:[#allocation8 + $0x300] sm:$0xff]
    %v772 = vld [vmem:[#allocation8 + $0x308] sm:$0xff]
    %v773 = vld [vmem:[#allocation8 + $0x310] sm:$0xff]
    %v774 = vld [vmem:[#allocation8 + $0x318] sm:$0xff]
    %v775 = vld [vmem:[#allocation8 + $0x320] sm:$0xff]
    %v776 = vld [vmem:[#allocation8 + $0x328] sm:$0xff]
    %v777 = vld [vmem:[#allocation8 + $0x330] sm:$0xff]
    %v778 = vld [vmem:[#allocation8 + $0x338] sm:$0xff]
    %v779 = vld [vmem:[#allocation8 + $0x340] sm:$0xff]
    %v780 = vld [vmem:[#allocation8 + $0x348] sm:$0xff]
    %v781 = vld [vmem:[#allocation8 + $0x350] sm:$0xff]
    %v782 = vld [vmem:[#allocation8 + $0x358] sm:$0xff]
    %v783 = vld [vmem:[#allocation8 + $0x360] sm:$0xff]
    %v784 = vld [vmem:[#allocation8 + $0x368] sm:$0xff]
    %v785 = vld [vmem:[#allocation8 + $0x370] sm:$0xff]
    %v786 = vld [vmem:[#allocation8 + $0x378] sm:$0xff]
    %v787 = vld [vmem:[#allocation8 + $0x380] sm:$0xff]
    %v788 = vld [vmem:[#allocation8 + $0x388] sm:$0xff]
    %v789 = vld [vmem:[#allocation8 + $0x390] sm:$0xff]
    %v790 = vld [vmem:[#allocation8 + $0x398] sm:$0xff]
    %v791 = vld [vmem:[#allocation8 + $0x3a0] sm:$0xff]
    %v792 = vld [vmem:[#allocation8 + $0x3a8] sm:$0xff]
    %v793 = vld [vmem:[#allocation8 + $0x3b0] sm:$0xff]
    %v794 = vld [vmem:[#allocation8 + $0x3b8] sm:$0xff]
    %v795 = vld [vmem:[#allocation8 + $0x3c0] sm:$0xff]
    %v796 = vld [vmem:[#allocation8 + $0x3c8] sm:$0xff]
    %v797 = vld [vmem:[#allocation8 + $0x3d0] sm:$0xff]
    %v798 = vld [vmem:[#allocation8 + $0x3d8] sm:$0xff]
    %v799 = vld [vmem:[#allocation8 + $0x3e0] sm:$0xff]
    %v800 = vld [vmem:[#allocation8 + $0x3e8] sm:$0xff]
    %v801 = vld [vmem:[#allocation8 + $0x3f0] sm:$0xff]
    %v802 = vld [vmem:[#allocation8 + $0x3f8] sm:$0xff]
    %v803 = vld [vmem:[#allocation10] sm:$0xf]
    %v805 = vperm.slane %v803, 0
    %v806 = vperm.slane %v803, 1
    %v807 = vperm.slane %v803, 2
    %v808 = vperm.slane %v803, 3
    %v941 = vunpack.c.l.b16 %v675
    %v942 = vunpack.c.h.b16 %v675
    %v943 = vunpack.c.l.b16 %v676
    %v944 = vunpack.c.h.b16 %v676
    %v945 = vunpack.c.l.b16 %v677
    %v946 = vunpack.c.h.b16 %v677
    %v947 = vunpack.c.l.b16 %v678
    %v948 = vunpack.c.h.b16 %v678
    %v949 = vunpack.c.l.b16 %v679
    %v950 = vunpack.c.h.b16 %v679
    %v951 = vunpack.c.l.b16 %v680
    %v952 = vunpack.c.h.b16 %v680
    %v953 = vunpack.c.l.b16 %v681
    %v954 = vunpack.c.h.b16 %v681
    %v955 = vunpack.c.l.b16 %v682
    %v956 = vunpack.c.h.b16 %v682
    %v957 = vunpack.c.l.b16 %v683
    %v958 = vunpack.c.h.b16 %v683
    %v959 = vunpack.c.l.b16 %v684
    %v960 = vunpack.c.h.b16 %v684
    %v961 = vunpack.c.l.b16 %v685
    %v962 = vunpack.c.h.b16 %v685
    %v963 = vunpack.c.l.b16 %v686
    %v964 = vunpack.c.h.b16 %v686
    %v965 = vunpack.c.l.b16 %v687
    %v966 = vunpack.c.h.b16 %v687
    %v967 = vunpack.c.l.b16 %v688
    %v968 = vunpack.c.h.b16 %v688
    %v969 = vunpack.c.l.b16 %v689
    %v970 = vunpack.c.h.b16 %v689
    %v971 = vunpack.c.l.b16 %v690
    %v972 = vunpack.c.h.b16 %v690
    %v973 = vunpack.c.l.b16 %v691
    %v974 = vunpack.c.h.b16 %v691
    %v975 = vunpack.c.l.b16 %v692
    %v976 = vunpack.c.h.b16 %v692
    %v977 = vunpack.c.l.b16 %v693
    %v978 = vunpack.c.h.b16 %v693
    %v979 = vunpack.c.l.b16 %v694
    %v980 = vunpack.c.h.b16 %v694
    %v981 = vunpack.c.l.b16 %v695
    %v982 = vunpack.c.h.b16 %v695
    %v983 = vunpack.c.l.b16 %v696
    %v984 = vunpack.c.h.b16 %v696
    %v985 = vunpack.c.l.b16 %v697
    %v986 = vunpack.c.h.b16 %v697
    %v987 = vunpack.c.l.b16 %v698
    %v988 = vunpack.c.h.b16 %v698
    %v989 = vunpack.c.l.b16 %v699
    %v990 = vunpack.c.h.b16 %v699
    %v991 = vunpack.c.l.b16 %v700
    %v992 = vunpack.c.h.b16 %v700
    %v993 = vunpack.c.l.b16 %v701
    %v994 = vunpack.c.h.b16 %v701
    %v995 = vunpack.c.l.b16 %v702
    %v996 = vunpack.c.h.b16 %v702
    %v997 = vunpack.c.l.b16 %v703
    %v998 = vunpack.c.h.b16 %v703
    %v999 = vunpack.c.l.b16 %v704
    %v1000 = vunpack.c.h.b16 %v704
    %v1001 = vunpack.c.l.b16 %v705
    %v1002 = vunpack.c.h.b16 %v705
    %v1003 = vunpack.c.l.b16 %v706
    %v1004 = vunpack.c.h.b16 %v706
    %v1005 = vunpack.c.l.b16 %v707
    %v1006 = vunpack.c.h.b16 %v707
    %v1007 = vunpack.c.l.b16 %v708
    %v1008 = vunpack.c.h.b16 %v708
    %v1009 = vunpack.c.l.b16 %v709
    %v1010 = vunpack.c.h.b16 %v709
    %v1011 = vunpack.c.l.b16 %v710
    %v1012 = vunpack.c.h.b16 %v710
    %v1013 = vunpack.c.l.b16 %v711
    %v1014 = vunpack.c.h.b16 %v711
    %v1015 = vunpack.c.l.b16 %v712
    %v1016 = vunpack.c.h.b16 %v712
    %v1017 = vunpack.c.l.b16 %v713
    %v1018 = vunpack.c.h.b16 %v713
    %v1019 = vunpack.c.l.b16 %v714
    %v1020 = vunpack.c.h.b16 %v714
    %v1021 = vunpack.c.l.b16 %v715
    %v1022 = vunpack.c.h.b16 %v715
    %v1023 = vunpack.c.l.b16 %v716
    %v1024 = vunpack.c.h.b16 %v716
    %v1025 = vunpack.c.l.b16 %v717
    %v1026 = vunpack.c.h.b16 %v717
    %v1027 = vunpack.c.l.b16 %v718
    %v1028 = vunpack.c.h.b16 %v718
    %v1029 = vunpack.c.l.b16 %v719
    %v1030 = vunpack.c.h.b16 %v719
    %v1031 = vunpack.c.l.b16 %v720
    %v1032 = vunpack.c.h.b16 %v720
    %v1033 = vunpack.c.l.b16 %v721
    %v1034 = vunpack.c.h.b16 %v721
    %v1035 = vunpack.c.l.b16 %v722
    %v1036 = vunpack.c.h.b16 %v722
    %v1037 = vunpack.c.l.b16 %v723
    %v1038 = vunpack.c.h.b16 %v723
    %v1039 = vunpack.c.l.b16 %v724
    %v1040 = vunpack.c.h.b16 %v724
    %v1041 = vunpack.c.l.b16 %v725
    %v1042 = vunpack.c.h.b16 %v725
    %v1043 = vunpack.c.l.b16 %v726
    %v1044 = vunpack.c.h.b16 %v726
    %v1045 = vunpack.c.l.b16 %v727
    %v1046 = vunpack.c.h.b16 %v727
    %v1047 = vunpack.c.l.b16 %v728
    %v1048 = vunpack.c.h.b16 %v728
    %v1049 = vunpack.c.l.b16 %v729
    %v1050 = vunpack.c.h.b16 %v729
    %v1051 = vunpack.c.l.b16 %v730
    %v1052 = vunpack.c.h.b16 %v730
    %v1053 = vunpack.c.l.b16 %v731
    %v1054 = vunpack.c.h.b16 %v731
    %v1055 = vunpack.c.l.b16 %v732
    %v1056 = vunpack.c.h.b16 %v732
    %v1057 = vunpack.c.l.b16 %v733
    %v1058 = vunpack.c.h.b16 %v733
    %v1059 = vunpack.c.l.b16 %v734
    %v1060 = vunpack.c.h.b16 %v734
    %v1061 = vunpack.c.l.b16 %v735
    %v1062 = vunpack.c.h.b16 %v735
    %v1063 = vunpack.c.l.b16 %v736
    %v1064 = vunpack.c.h.b16 %v736
    %v1065 = vunpack.c.l.b16 %v737
    %v1066 = vunpack.c.h.b16 %v737
    %v1067 = vunpack.c.l.b16 %v738
    %v1068 = vunpack.c.h.b16 %v738
    %v1069 = vunpack.c.l.b16 %v739
    %v1070 = vunpack.c.h.b16 %v739
    %v1071 = vunpack.c.l.b16 %v740
    %v1072 = vunpack.c.h.b16 %v740
    %v1073 = vunpack.c.l.b16 %v741
    %v1074 = vunpack.c.h.b16 %v741
    %v1075 = vunpack.c.l.b16 %v742
    %v1076 = vunpack.c.h.b16 %v742
    %v1077 = vunpack.c.l.b16 %v743
    %v1078 = vunpack.c.h.b16 %v743
    %v1079 = vunpack.c.l.b16 %v744
    %v1080 = vunpack.c.h.b16 %v744
    %v1081 = vunpack.c.l.b16 %v745
    %v1082 = vunpack.c.h.b16 %v745
    %v1083 = vunpack.c.l.b16 %v746
    %v1084 = vunpack.c.h.b16 %v746
    %v1085 = vunpack.c.l.b16 %v747
    %v1086 = vunpack.c.h.b16 %v747
    %v1087 = vunpack.c.l.b16 %v748
    %v1088 = vunpack.c.h.b16 %v748
    %v1089 = vunpack.c.l.b16 %v749
    %v1090 = vunpack.c.h.b16 %v749
    %v1091 = vunpack.c.l.b16 %v750
    %v1092 = vunpack.c.h.b16 %v750
    %v1093 = vunpack.c.l.b16 %v751
    %v1094 = vunpack.c.h.b16 %v751
    %v1095 = vunpack.c.l.b16 %v752
    %v1096 = vunpack.c.h.b16 %v752
    %v1097 = vunpack.c.l.b16 %v753
    %v1098 = vunpack.c.h.b16 %v753
    %v1099 = vunpack.c.l.b16 %v754
    %v1100 = vunpack.c.h.b16 %v754
    %v1101 = vunpack.c.l.b16 %v755
    %v1102 = vunpack.c.h.b16 %v755
    %v1103 = vunpack.c.l.b16 %v756
    %v1104 = vunpack.c.h.b16 %v756
    %v1105 = vunpack.c.l.b16 %v757
    %v1106 = vunpack.c.h.b16 %v757
    %v1107 = vunpack.c.l.b16 %v758
    %v1108 = vunpack.c.h.b16 %v758
    %v1109 = vunpack.c.l.b16 %v759
    %v1110 = vunpack.c.h.b16 %v759
    %v1111 = vunpack.c.l.b16 %v760
    %v1112 = vunpack.c.h.b16 %v760
    %v1113 = vunpack.c.l.b16 %v761
    %v1114 = vunpack.c.h.b16 %v761
    %v1115 = vunpack.c.l.b16 %v762
    %v1116 = vunpack.c.h.b16 %v762
    %v1117 = vunpack.c.l.b16 %v763
    %v1118 = vunpack.c.h.b16 %v763
    %v1119 = vunpack.c.l.b16 %v764
    %v1120 = vunpack.c.h.b16 %v764
    %v1121 = vunpack.c.l.b16 %v765
    %v1122 = vunpack.c.h.b16 %v765
    %v1123 = vunpack.c.l.b16 %v766
    %v1124 = vunpack.c.h.b16 %v766
    %v1125 = vunpack.c.l.b16 %v767
    %v1126 = vunpack.c.h.b16 %v767
    %v1127 = vunpack.c.l.b16 %v768
    %v1128 = vunpack.c.h.b16 %v768
    %v1129 = vunpack.c.l.b16 %v769
    %v1130 = vunpack.c.h.b16 %v769
    %v1131 = vunpack.c.l.b16 %v770
    %v1132 = vunpack.c.h.b16 %v770
    %v1133 = vunpack.c.l.b16 %v771
    %v1134 = vunpack.c.h.b16 %v771
    %v1135 = vunpack.c.l.b16 %v772
    %v1136 = vunpack.c.h.b16 %v772
    %v1137 = vunpack.c.l.b16 %v773
    %v1138 = vunpack.c.h.b16 %v773
    %v1139 = vunpack.c.l.b16 %v774
    %v1140 = vunpack.c.h.b16 %v774
    %v1141 = vunpack.c.l.b16 %v775
    %v1142 = vunpack.c.h.b16 %v775
    %v1143 = vunpack.c.l.b16 %v776
    %v1144 = vunpack.c.h.b16 %v776
    %v1145 = vunpack.c.l.b16 %v777
    %v1146 = vunpack.c.h.b16 %v777
    %v1147 = vunpack.c.l.b16 %v778
    %v1148 = vunpack.c.h.b16 %v778
    %v1149 = vunpack.c.l.b16 %v779
    %v1150 = vunpack.c.h.b16 %v779
    %v1151 = vunpack.c.l.b16 %v780
    %v1152 = vunpack.c.h.b16 %v780
    %v1153 = vunpack.c.l.b16 %v781
    %v1154 = vunpack.c.h.b16 %v781
    %v1155 = vunpack.c.l.b16 %v782
    %v1156 = vunpack.c.h.b16 %v782
    %v1157 = vunpack.c.l.b16 %v783
    %v1158 = vunpack.c.h.b16 %v783
    %v1159 = vunpack.c.l.b16 %v784
    %v1160 = vunpack.c.h.b16 %v784
    %v1161 = vunpack.c.l.b16 %v785
    %v1162 = vunpack.c.h.b16 %v785
    %v1163 = vunpack.c.l.b16 %v786
    %v1164 = vunpack.c.h.b16 %v786
    %v1165 = vunpack.c.l.b16 %v787
    %v1166 = vunpack.c.h.b16 %v787
    %v1167 = vunpack.c.l.b16 %v788
    %v1168 = vunpack.c.h.b16 %v788
    %v1169 = vunpack.c.l.b16 %v789
    %v1170 = vunpack.c.h.b16 %v789
    %v1171 = vunpack.c.l.b16 %v790
    %v1172 = vunpack.c.h.b16 %v790
    %v1173 = vunpack.c.l.b16 %v791
    %v1174 = vunpack.c.h.b16 %v791
    %v1175 = vunpack.c.l.b16 %v792
    %v1176 = vunpack.c.h.b16 %v792
    %v1177 = vunpack.c.l.b16 %v793
    %v1178 = vunpack.c.h.b16 %v793
    %v1179 = vunpack.c.l.b16 %v794
    %v1180 = vunpack.c.h.b16 %v794
    %v1181 = vunpack.c.l.b16 %v795
    %v1182 = vunpack.c.h.b16 %v795
    %v1183 = vunpack.c.l.b16 %v796
    %v1184 = vunpack.c.h.b16 %v796
    %v1185 = vunpack.c.l.b16 %v797
    %v1186 = vunpack.c.h.b16 %v797
    %v1187 = vunpack.c.l.b16 %v798
    %v1188 = vunpack.c.h.b16 %v798
    %v1189 = vunpack.c.l.b16 %v799
    %v1190 = vunpack.c.h.b16 %v799
    %v1191 = vunpack.c.l.b16 %v800
    %v1192 = vunpack.c.h.b16 %v800
    %v1193 = vunpack.c.l.b16 %v801
    %v1194 = vunpack.c.h.b16 %v801
    %v1195 = vunpack.c.l.b16 %v802
    %v1196 = vunpack.c.h.b16 %v802
    %v1197 = vpack.c.b16 %v945, %v941
    %v1198 = vpack.c.b16 %v946, %v942
    %v1199 = vpack.c.b16 %v947, %v943
    %v1200 = vpack.c.b16 %v948, %v944
    %v1201 = vpack.c.b16 %v953, %v949
    %v1202 = vpack.c.b16 %v954, %v950
    %v1203 = vpack.c.b16 %v955, %v951
    %v1204 = vpack.c.b16 %v956, %v952
    %v1205 = vpack.c.b16 %v961, %v957
    %v1206 = vpack.c.b16 %v962, %v958
    %v1207 = vpack.c.b16 %v963, %v959
    %v1208 = vpack.c.b16 %v964, %v960
    %v1209 = vpack.c.b16 %v969, %v965
    %v1210 = vpack.c.b16 %v970, %v966
    %v1211 = vpack.c.b16 %v971, %v967
    %v1212 = vpack.c.b16 %v972, %v968
    %v1213 = vpack.c.b16 %v977, %v973
    %v1214 = vpack.c.b16 %v978, %v974
    %v1215 = vpack.c.b16 %v979, %v975
    %v1216 = vpack.c.b16 %v980, %v976
    %v1217 = vpack.c.b16 %v985, %v981
    %v1218 = vpack.c.b16 %v986, %v982
    %v1219 = vpack.c.b16 %v987, %v983
    %v1220 = vpack.c.b16 %v988, %v984
    %v1221 = vpack.c.b16 %v993, %v989
    %v1222 = vpack.c.b16 %v994, %v990
    %v1223 = vpack.c.b16 %v995, %v991
    %v1224 = vpack.c.b16 %v996, %v992
    %v1225 = vpack.c.b16 %v1001, %v997
    %v1226 = vpack.c.b16 %v1002, %v998
    %v1227 = vpack.c.b16 %v1003, %v999
    %v1228 = vpack.c.b16 %v1004, %v1000
    %v1229 = vpack.c.b16 %v1009, %v1005
    %v1230 = vpack.c.b16 %v1010, %v1006
    %v1231 = vpack.c.b16 %v1011, %v1007
    %v1232 = vpack.c.b16 %v1012, %v1008
    %v1233 = vpack.c.b16 %v1017, %v1013
    %v1234 = vpack.c.b16 %v1018, %v1014
    %v1235 = vpack.c.b16 %v1019, %v1015
    %v1236 = vpack.c.b16 %v1020, %v1016
    %v1237 = vpack.c.b16 %v1025, %v1021
    %v1238 = vpack.c.b16 %v1026, %v1022
    %v1239 = vpack.c.b16 %v1027, %v1023
    %v1240 = vpack.c.b16 %v1028, %v1024
    %v1241 = vpack.c.b16 %v1033, %v1029
    %v1242 = vpack.c.b16 %v1034, %v1030
    %v1243 = vpack.c.b16 %v1035, %v1031
    %v1244 = vpack.c.b16 %v1036, %v1032
    %v1245 = vpack.c.b16 %v1041, %v1037
    %v1246 = vpack.c.b16 %v1042, %v1038
    %v1247 = vpack.c.b16 %v1043, %v1039
    %v1248 = vpack.c.b16 %v1044, %v1040
    %v1249 = vpack.c.b16 %v1049, %v1045
    %v1250 = vpack.c.b16 %v1050, %v1046
    %v1251 = vpack.c.b16 %v1051, %v1047
    %v1252 = vpack.c.b16 %v1052, %v1048
    %v1253 = vpack.c.b16 %v1057, %v1053
    %v1254 = vpack.c.b16 %v1058, %v1054
    %v1255 = vpack.c.b16 %v1059, %v1055
    %v1256 = vpack.c.b16 %v1060, %v1056
    %v1257 = vpack.c.b16 %v1065, %v1061
    %v1258 = vpack.c.b16 %v1066, %v1062
    %v1259 = vpack.c.b16 %v1067, %v1063
    %v1260 = vpack.c.b16 %v1068, %v1064
    %v1261 = vpack.c.b16 %v1073, %v1069
    %v1262 = vpack.c.b16 %v1074, %v1070
    %v1263 = vpack.c.b16 %v1075, %v1071
    %v1264 = vpack.c.b16 %v1076, %v1072
    %v1265 = vpack.c.b16 %v1081, %v1077
    %v1266 = vpack.c.b16 %v1082, %v1078
    %v1267 = vpack.c.b16 %v1083, %v1079
    %v1268 = vpack.c.b16 %v1084, %v1080
    %v1269 = vpack.c.b16 %v1089, %v1085
    %v1270 = vpack.c.b16 %v1090, %v1086
    %v1271 = vpack.c.b16 %v1091, %v1087
    %v1272 = vpack.c.b16 %v1092, %v1088
    %v1273 = vpack.c.b16 %v1097, %v1093
    %v1274 = vpack.c.b16 %v1098, %v1094
    %v1275 = vpack.c.b16 %v1099, %v1095
    %v1276 = vpack.c.b16 %v1100, %v1096
    %v1277 = vpack.c.b16 %v1105, %v1101
    %v1278 = vpack.c.b16 %v1106, %v1102
    %v1279 = vpack.c.b16 %v1107, %v1103
    %v1280 = vpack.c.b16 %v1108, %v1104
    %v1281 = vpack.c.b16 %v1113, %v1109
    %v1282 = vpack.c.b16 %v1114, %v1110
    %v1283 = vpack.c.b16 %v1115, %v1111
    %v1284 = vpack.c.b16 %v1116, %v1112
    %v1285 = vpack.c.b16 %v1121, %v1117
    %v1286 = vpack.c.b16 %v1122, %v1118
    %v1287 = vpack.c.b16 %v1123, %v1119
    %v1288 = vpack.c.b16 %v1124, %v1120
    %v1289 = vpack.c.b16 %v1129, %v1125
    %v1290 = vpack.c.b16 %v1130, %v1126
    %v1291 = vpack.c.b16 %v1131, %v1127
    %v1292 = vpack.c.b16 %v1132, %v1128
    %v1293 = vpack.c.b16 %v1137, %v1133
    %v1294 = vpack.c.b16 %v1138, %v1134
    %v1295 = vpack.c.b16 %v1139, %v1135
    %v1296 = vpack.c.b16 %v1140, %v1136
    %v1297 = vpack.c.b16 %v1145, %v1141
    %v1298 = vpack.c.b16 %v1146, %v1142
    %v1299 = vpack.c.b16 %v1147, %v1143
    %v1300 = vpack.c.b16 %v1148, %v1144
    %v1301 = vpack.c.b16 %v1153, %v1149
    %v1302 = vpack.c.b16 %v1154, %v1150
    %v1303 = vpack.c.b16 %v1155, %v1151
    %v1304 = vpack.c.b16 %v1156, %v1152
    %v1305 = vpack.c.b16 %v1161, %v1157
    %v1306 = vpack.c.b16 %v1162, %v1158
    %v1307 = vpack.c.b16 %v1163, %v1159
    %v1308 = vpack.c.b16 %v1164, %v1160
    %v1309 = vpack.c.b16 %v1169, %v1165
    %v1310 = vpack.c.b16 %v1170, %v1166
    %v1311 = vpack.c.b16 %v1171, %v1167
    %v1312 = vpack.c.b16 %v1172, %v1168
    %v1313 = vpack.c.b16 %v1177, %v1173
    %v1314 = vpack.c.b16 %v1178, %v1174
    %v1315 = vpack.c.b16 %v1179, %v1175
    %v1316 = vpack.c.b16 %v1180, %v1176
    %v1317 = vpack.c.b16 %v1185, %v1181
    %v1318 = vpack.c.b16 %v1186, %v1182
    %v1319 = vpack.c.b16 %v1187, %v1183
    %v1320 = vpack.c.b16 %v1188, %v1184
    %v1321 = vpack.c.b16 %v1193, %v1189
    %v1322 = vpack.c.b16 %v1194, %v1190
    %v1323 = vpack.c.b16 %v1195, %v1191
    %v1324 = vpack.c.b16 %v1196, %v1192
    %1453 = vmatpush.bf16.msra.mxu0 %v1225
    %1454 = vmatpush.bf16.msra.mxu0 %v1221
    %1455 = vmatpush.bf16.msra.mxu0 %v1217
    %1456 = vmatpush.bf16.msra.mxu0 %v1213
    %1457 = vmatpush.bf16.msra.mxu0 %v1209
    %1458 = vmatpush.bf16.msra.mxu0 %v1205
    %1459 = vmatpush.bf16.msra.mxu0 %v1201
    %1460 = vmatpush.bf16.msra.mxu0 %v1197
    %1461 = vmatmul.bf16.gmra.mxu0 %v643
    %v1462 = vpop.f32.mrf.mxu0
    %v1463 = vadd.f32 %v805, %v1462
    %v1464 = vpop.f32.mrf.mxu0
    %v1465 = vadd.f32 %v805, %v1464
    %1466 = vmatmul.bf16.gmra.mxu0 %v647
    %v1467 = vpop.f32.mrf.mxu0
    %v1468 = vadd.f32 %v805, %v1467
    %v1469 = vpop.f32.mrf.mxu0
    %v1470 = vadd.f32 %v805, %v1469
    %1471 = vmatmul.bf16.gmra.mxu0 %v651
    %v1472 = vpop.f32.mrf.mxu0
    %v1473 = vadd.f32 %v805, %v1472
    %v1474 = vpop.f32.mrf.mxu0
    %v1475 = vadd.f32 %v805, %v1474
    %1476 = vmatmul.bf16.gmra.mxu0 %v655
    %v1477 = vpop.f32.mrf.mxu0
    %v1478 = vadd.f32 %v805, %v1477
    %v1479 = vpop.f32.mrf.mxu0
    %v1480 = vadd.f32 %v805, %v1479
    %1481 = vmatmul.bf16.gmra.mxu0 %v659
    %v1482 = vpop.f32.mrf.mxu0
    %v1483 = vadd.f32 %v805, %v1482
    %v1484 = vpop.f32.mrf.mxu0
    %v1485 = vadd.f32 %v805, %v1484
    %1486 = vmatmul.bf16.gmra.mxu0 %v663
    %v1487 = vpop.f32.mrf.mxu0
    %v1488 = vadd.f32 %v805, %v1487
    %v1489 = vpop.f32.mrf.mxu0
    %v1490 = vadd.f32 %v805, %v1489
    %1491 = vmatmul.bf16.gmra.mxu0 %v667
    %v1492 = vpop.f32.mrf.mxu0
    %v1493 = vadd.f32 %v805, %v1492
    %v1494 = vpop.f32.mrf.mxu0
    %v1495 = vadd.f32 %v805, %v1494
    %1496 = vmatmul.bf16.gmra.mxu0 %v671
    %v1497 = vpop.f32.mrf.mxu0
    %v1498 = vadd.f32 %v805, %v1497
    %v1499 = vpop.f32.mrf.mxu0
    %v1500 = vadd.f32 %v805, %v1499
    %1501 = vdwg.mxu0
    %1502 = vmatpush.bf16.msra.mxu0 %v1257
    %1503 = vmatpush.bf16.msra.mxu0 %v1253
    %1504 = vmatpush.bf16.msra.mxu0 %v1249
    %1505 = vmatpush.bf16.msra.mxu0 %v1245
    %1506 = vmatpush.bf16.msra.mxu0 %v1241
    %1507 = vmatpush.bf16.msra.mxu0 %v1237
    %1508 = vmatpush.bf16.msra.mxu0 %v1233
    %1509 = vmatpush.bf16.msra.mxu0 %v1229
    %1510 = vmatmul.bf16.gmra.mxu0 %v644
    %v1511 = vpop.f32.mrf.mxu0
    %v1512 = vadd.f32 %v1463, %v1511
    %v1513 = vpop.f32.mrf.mxu0
    %v1514 = vadd.f32 %v1465, %v1513
    %1515 = vmatmul.bf16.gmra.mxu0 %v648
    %v1516 = vpop.f32.mrf.mxu0
    %v1517 = vadd.f32 %v1468, %v1516
    %v1518 = vpop.f32.mrf.mxu0
    %v1519 = vadd.f32 %v1470, %v1518
    %1520 = vmatmul.bf16.gmra.mxu0 %v652
    %v1521 = vpop.f32.mrf.mxu0
    %v1522 = vadd.f32 %v1473, %v1521
    %v1523 = vpop.f32.mrf.mxu0
    %v1524 = vadd.f32 %v1475, %v1523
    %1525 = vmatmul.bf16.gmra.mxu0 %v656
    %v1526 = vpop.f32.mrf.mxu0
    %v1527 = vadd.f32 %v1478, %v1526
    %v1528 = vpop.f32.mrf.mxu0
    %v1529 = vadd.f32 %v1480, %v1528
    %1530 = vmatmul.bf16.gmra.mxu0 %v660
    %v1531 = vpop.f32.mrf.mxu0
    %v1532 = vadd.f32 %v1483, %v1531
    %v1533 = vpop.f32.mrf.mxu0
    %v1534 = vadd.f32 %v1485, %v1533
    %1535 = vmatmul.bf16.gmra.mxu0 %v664
    %v1536 = vpop.f32.mrf.mxu0
    %v1537 = vadd.f32 %v1488, %v1536
    %v1538 = vpop.f32.mrf.mxu0
    %v1539 = vadd.f32 %v1490, %v1538
    %1540 = vmatmul.bf16.gmra.mxu0 %v668
    %v1541 = vpop.f32.mrf.mxu0
    %v1542 = vadd.f32 %v1493, %v1541
    %v1543 = vpop.f32.mrf.mxu0
    %v1544 = vadd.f32 %v1495, %v1543
    %1545 = vmatmul.bf16.gmra.mxu0 %v672
    %v1546 = vpop.f32.mrf.mxu0
    %v1547 = vadd.f32 %v1498, %v1546
    %v1548 = vpop.f32.mrf.mxu0
    %v1549 = vadd.f32 %v1500, %v1548
    %1550 = vdwg.mxu0
    %1551 = vmatpush.bf16.msra.mxu0 %v1289
    %1552 = vmatpush.bf16.msra.mxu0 %v1285
    %1553 = vmatpush.bf16.msra.mxu0 %v1281
    %1554 = vmatpush.bf16.msra.mxu0 %v1277
    %1555 = vmatpush.bf16.msra.mxu0 %v1273
    %1556 = vmatpush.bf16.msra.mxu0 %v1269
    %1557 = vmatpush.bf16.msra.mxu0 %v1265
    %1558 = vmatpush.bf16.msra.mxu0 %v1261
    %1559 = vmatmul.bf16.gmra.mxu0 %v645
    %v1560 = vpop.f32.mrf.mxu0
    %v1561 = vadd.f32 %v1512, %v1560
    %v1562 = vpop.f32.mrf.mxu0
    %v1563 = vadd.f32 %v1514, %v1562
    %1564 = vmatmul.bf16.gmra.mxu0 %v649
    %v1565 = vpop.f32.mrf.mxu0
    %v1566 = vadd.f32 %v1517, %v1565
    %v1567 = vpop.f32.mrf.mxu0
    %v1568 = vadd.f32 %v1519, %v1567
    %1569 = vmatmul.bf16.gmra.mxu0 %v653
    %v1570 = vpop.f32.mrf.mxu0
    %v1571 = vadd.f32 %v1522, %v1570
    %v1572 = vpop.f32.mrf.mxu0
    %v1573 = vadd.f32 %v1524, %v1572
    %1574 = vmatmul.bf16.gmra.mxu0 %v657
    %v1575 = vpop.f32.mrf.mxu0
    %v1576 = vadd.f32 %v1527, %v1575
    %v1577 = vpop.f32.mrf.mxu0
    %v1578 = vadd.f32 %v1529, %v1577
    %1579 = vmatmul.bf16.gmra.mxu0 %v661
    %v1580 = vpop.f32.mrf.mxu0
    %v1581 = vadd.f32 %v1532, %v1580
    %v1582 = vpop.f32.mrf.mxu0
    %v1583 = vadd.f32 %v1534, %v1582
    %1584 = vmatmul.bf16.gmra.mxu0 %v665
    %v1585 = vpop.f32.mrf.mxu0
    %v1586 = vadd.f32 %v1537, %v1585
    %v1587 = vpop.f32.mrf.mxu0
    %v1588 = vadd.f32 %v1539, %v1587
    %1589 = vmatmul.bf16.gmra.mxu0 %v669
    %v1590 = vpop.f32.mrf.mxu0
    %v1591 = vadd.f32 %v1542, %v1590
    %v1592 = vpop.f32.mrf.mxu0
    %v1593 = vadd.f32 %v1544, %v1592
    %1594 = vmatmul.bf16.gmra.mxu0 %v673
    %v1595 = vpop.f32.mrf.mxu0
    %v1596 = vadd.f32 %v1547, %v1595
    %v1597 = vpop.f32.mrf.mxu0
    %v1598 = vadd.f32 %v1549, %v1597
    %1599 = vdwg.mxu0
    %1600 = vmatpush.bf16.msra.mxu0 %v1321
    %1601 = vmatpush.bf16.msra.mxu0 %v1317
    %1602 = vmatpush.bf16.msra.mxu0 %v1313
    %1603 = vmatpush.bf16.msra.mxu0 %v1309
    %1604 = vmatpush.bf16.msra.mxu0 %v1305
    %1605 = vmatpush.bf16.msra.mxu0 %v1301
    %1606 = vmatpush.bf16.msra.mxu0 %v1297
    %1607 = vmatpush.bf16.msra.mxu0 %v1293
    %1608 = vmatmul.bf16.gmra.mxu0 %v646
    %v1609 = vpop.f32.mrf.mxu0
    %v1610 = vadd.f32 %v1561, %v1609
    %v1611 = vpop.f32.mrf.mxu0
    %v1612 = vadd.f32 %v1563, %v1611
    %1613 = vmatmul.bf16.gmra.mxu0 %v650
    %v1614 = vpop.f32.mrf.mxu0
    %v1615 = vadd.f32 %v1566, %v1614
    %v1616 = vpop.f32.mrf.mxu0
    %v1617 = vadd.f32 %v1568, %v1616
    %1618 = vmatmul.bf16.gmra.mxu0 %v654
    %v1619 = vpop.f32.mrf.mxu0
    %v1620 = vadd.f32 %v1571, %v1619
    %v1621 = vpop.f32.mrf.mxu0
    %v1622 = vadd.f32 %v1573, %v1621
    %1623 = vmatmul.bf16.gmra.mxu0 %v658
    %v1624 = vpop.f32.mrf.mxu0
    %v1625 = vadd.f32 %v1576, %v1624
    %v1626 = vpop.f32.mrf.mxu0
    %v1627 = vadd.f32 %v1578, %v1626
    %1628 = vmatmul.bf16.gmra.mxu0 %v662
    %v1629 = vpop.f32.mrf.mxu0
    %v1630 = vadd.f32 %v1581, %v1629
    %v1631 = vpop.f32.mrf.mxu0
    %v1632 = vadd.f32 %v1583, %v1631
    %1633 = vmatmul.bf16.gmra.mxu0 %v666
    %v1634 = vpop.f32.mrf.mxu0
    %v1635 = vadd.f32 %v1586, %v1634
    %v1636 = vpop.f32.mrf.mxu0
    %v1637 = vadd.f32 %v1588, %v1636
    %1638 = vmatmul.bf16.gmra.mxu0 %v670
    %v1639 = vpop.f32.mrf.mxu0
    %v1640 = vadd.f32 %v1591, %v1639
    %v1641 = vpop.f32.mrf.mxu0
    %v1642 = vadd.f32 %v1593, %v1641
    %1643 = vmatmul.bf16.gmra.mxu0 %v674
    %v1644 = vpop.f32.mrf.mxu0
    %v1645 = vadd.f32 %v1596, %v1644
    %v1646 = vpop.f32.mrf.mxu0
    %v1647 = vadd.f32 %v1598, %v1646
    %1648 = vdwg.mxu0
    %1649 = vmatpush.bf16.msra.mxu0 %v1226
    %1650 = vmatpush.bf16.msra.mxu0 %v1222
    %1651 = vmatpush.bf16.msra.mxu0 %v1218
    %1652 = vmatpush.bf16.msra.mxu0 %v1214
    %1653 = vmatpush.bf16.msra.mxu0 %v1210
    %1654 = vmatpush.bf16.msra.mxu0 %v1206
    %1655 = vmatpush.bf16.msra.mxu0 %v1202
    %1656 = vmatpush.bf16.msra.mxu0 %v1198
    %1657 = vmatmul.bf16.gmra.mxu0 %v643
    %v1658 = vpop.f32.mrf.mxu0
    %v1659 = vadd.f32 %v806, %v1658
    %v1660 = vpop.f32.mrf.mxu0
    %v1661 = vadd.f32 %v806, %v1660
    %1662 = vmatmul.bf16.gmra.mxu0 %v647
    %v1663 = vpop.f32.mrf.mxu0
    %v1664 = vadd.f32 %v806, %v1663
    %v1665 = vpop.f32.mrf.mxu0
    %v1666 = vadd.f32 %v806, %v1665
    %1667 = vmatmul.bf16.gmra.mxu0 %v651
    %v1668 = vpop.f32.mrf.mxu0
    %v1669 = vadd.f32 %v806, %v1668
    %v1670 = vpop.f32.mrf.mxu0
    %v1671 = vadd.f32 %v806, %v1670
    %1672 = vmatmul.bf16.gmra.mxu0 %v655
    %v1673 = vpop.f32.mrf.mxu0
    %v1674 = vadd.f32 %v806, %v1673
    %v1675 = vpop.f32.mrf.mxu0
    %v1676 = vadd.f32 %v806, %v1675
    %1677 = vmatmul.bf16.gmra.mxu0 %v659
    %v1678 = vpop.f32.mrf.mxu0
    %v1679 = vadd.f32 %v806, %v1678
    %v1680 = vpop.f32.mrf.mxu0
    %v1681 = vadd.f32 %v806, %v1680
    %1682 = vmatmul.bf16.gmra.mxu0 %v663
    %v1683 = vpop.f32.mrf.mxu0
    %v1684 = vadd.f32 %v806, %v1683
    %v1685 = vpop.f32.mrf.mxu0
    %v1686 = vadd.f32 %v806, %v1685
    %1687 = vmatmul.bf16.gmra.mxu0 %v667
    %v1688 = vpop.f32.mrf.mxu0
    %v1689 = vadd.f32 %v806, %v1688
    %v1690 = vpop.f32.mrf.mxu0
    %v1691 = vadd.f32 %v806, %v1690
    %1692 = vmatmul.bf16.gmra.mxu0 %v671
    %v1693 = vpop.f32.mrf.mxu0
    %v1694 = vadd.f32 %v806, %v1693
    %v1695 = vpop.f32.mrf.mxu0
    %v1696 = vadd.f32 %v806, %v1695
    %1697 = vdwg.mxu0
    %1698 = vmatpush.bf16.msra.mxu0 %v1258
    %1699 = vmatpush.bf16.msra.mxu0 %v1254
    %1700 = vmatpush.bf16.msra.mxu0 %v1250
    %1701 = vmatpush.bf16.msra.mxu0 %v1246
    %1702 = vmatpush.bf16.msra.mxu0 %v1242
    %1703 = vmatpush.bf16.msra.mxu0 %v1238
    %1704 = vmatpush.bf16.msra.mxu0 %v1234
    %1705 = vmatpush.bf16.msra.mxu0 %v1230
    %1706 = vmatmul.bf16.gmra.mxu0 %v644
    %v1707 = vpop.f32.mrf.mxu0
    %v1708 = vadd.f32 %v1659, %v1707
    %v1709 = vpop.f32.mrf.mxu0
    %v1710 = vadd.f32 %v1661, %v1709
    %1711 = vmatmul.bf16.gmra.mxu0 %v648
    %v1712 = vpop.f32.mrf.mxu0
    %v1713 = vadd.f32 %v1664, %v1712
    %v1714 = vpop.f32.mrf.mxu0
    %v1715 = vadd.f32 %v1666, %v1714
    %1716 = vmatmul.bf16.gmra.mxu0 %v652
    %v1717 = vpop.f32.mrf.mxu0
    %v1718 = vadd.f32 %v1669, %v1717
    %v1719 = vpop.f32.mrf.mxu0
    %v1720 = vadd.f32 %v1671, %v1719
    %1721 = vmatmul.bf16.gmra.mxu0 %v656
    %v1722 = vpop.f32.mrf.mxu0
    %v1723 = vadd.f32 %v1674, %v1722
    %v1724 = vpop.f32.mrf.mxu0
    %v1725 = vadd.f32 %v1676, %v1724
    %1726 = vmatmul.bf16.gmra.mxu0 %v660
    %v1727 = vpop.f32.mrf.mxu0
    %v1728 = vadd.f32 %v1679, %v1727
    %v1729 = vpop.f32.mrf.mxu0
    %v1730 = vadd.f32 %v1681, %v1729
    %1731 = vmatmul.bf16.gmra.mxu0 %v664
    %v1732 = vpop.f32.mrf.mxu0
    %v1733 = vadd.f32 %v1684, %v1732
    %v1734 = vpop.f32.mrf.mxu0
    %v1735 = vadd.f32 %v1686, %v1734
    %1736 = vmatmul.bf16.gmra.mxu0 %v668
    %v1737 = vpop.f32.mrf.mxu0
    %v1738 = vadd.f32 %v1689, %v1737
    %v1739 = vpop.f32.mrf.mxu0
    %v1740 = vadd.f32 %v1691, %v1739
    %1741 = vmatmul.bf16.gmra.mxu0 %v672
    %v1742 = vpop.f32.mrf.mxu0
    %v1743 = vadd.f32 %v1694, %v1742
    %v1744 = vpop.f32.mrf.mxu0
    %v1745 = vadd.f32 %v1696, %v1744
    %1746 = vdwg.mxu0
    %1747 = vmatpush.bf16.msra.mxu0 %v1290
    %1748 = vmatpush.bf16.msra.mxu0 %v1286
    %1749 = vmatpush.bf16.msra.mxu0 %v1282
    %1750 = vmatpush.bf16.msra.mxu0 %v1278
    %1751 = vmatpush.bf16.msra.mxu0 %v1274
    %1752 = vmatpush.bf16.msra.mxu0 %v1270
    %1753 = vmatpush.bf16.msra.mxu0 %v1266
    %1754 = vmatpush.bf16.msra.mxu0 %v1262
    %1755 = vmatmul.bf16.gmra.mxu0 %v645
    %v1756 = vpop.f32.mrf.mxu0
    %v1757 = vadd.f32 %v1708, %v1756
    %v1758 = vpop.f32.mrf.mxu0
    %v1759 = vadd.f32 %v1710, %v1758
    %1760 = vmatmul.bf16.gmra.mxu0 %v649
    %v1761 = vpop.f32.mrf.mxu0
    %v1762 = vadd.f32 %v1713, %v1761
    %v1763 = vpop.f32.mrf.mxu0
    %v1764 = vadd.f32 %v1715, %v1763
    %1765 = vmatmul.bf16.gmra.mxu0 %v653
    %v1766 = vpop.f32.mrf.mxu0
    %v1767 = vadd.f32 %v1718, %v1766
    %v1768 = vpop.f32.mrf.mxu0
    %v1769 = vadd.f32 %v1720, %v1768
    %1770 = vmatmul.bf16.gmra.mxu0 %v657
    %v1771 = vpop.f32.mrf.mxu0
    %v1772 = vadd.f32 %v1723, %v1771
    %v1773 = vpop.f32.mrf.mxu0
    %v1774 = vadd.f32 %v1725, %v1773
    %1775 = vmatmul.bf16.gmra.mxu0 %v661
    %v1776 = vpop.f32.mrf.mxu0
    %v1777 = vadd.f32 %v1728, %v1776
    %v1778 = vpop.f32.mrf.mxu0
    %v1779 = vadd.f32 %v1730, %v1778
    %1780 = vmatmul.bf16.gmra.mxu0 %v665
    %v1781 = vpop.f32.mrf.mxu0
    %v1782 = vadd.f32 %v1733, %v1781
    %v1783 = vpop.f32.mrf.mxu0
    %v1784 = vadd.f32 %v1735, %v1783
    %1785 = vmatmul.bf16.gmra.mxu0 %v669
    %v1786 = vpop.f32.mrf.mxu0
    %v1787 = vadd.f32 %v1738, %v1786
    %v1788 = vpop.f32.mrf.mxu0
    %v1789 = vadd.f32 %v1740, %v1788
    %1790 = vmatmul.bf16.gmra.mxu0 %v673
    %v1791 = vpop.f32.mrf.mxu0
    %v1792 = vadd.f32 %v1743, %v1791
    %v1793 = vpop.f32.mrf.mxu0
    %v1794 = vadd.f32 %v1745, %v1793
    %1795 = vdwg.mxu0
    %1796 = vmatpush.bf16.msra.mxu0 %v1322
    %1797 = vmatpush.bf16.msra.mxu0 %v1318
    %1798 = vmatpush.bf16.msra.mxu0 %v1314
    %1799 = vmatpush.bf16.msra.mxu0 %v1310
    %1800 = vmatpush.bf16.msra.mxu0 %v1306
    %1801 = vmatpush.bf16.msra.mxu0 %v1302
    %1802 = vmatpush.bf16.msra.mxu0 %v1298
    %1803 = vmatpush.bf16.msra.mxu0 %v1294
    %1804 = vmatmul.bf16.gmra.mxu0 %v646
    %v1805 = vpop.f32.mrf.mxu0
    %v1806 = vadd.f32 %v1757, %v1805
    %v1807 = vpop.f32.mrf.mxu0
    %v1808 = vadd.f32 %v1759, %v1807
    %1809 = vmatmul.bf16.gmra.mxu0 %v650
    %v1810 = vpop.f32.mrf.mxu0
    %v1811 = vadd.f32 %v1762, %v1810
    %v1812 = vpop.f32.mrf.mxu0
    %v1813 = vadd.f32 %v1764, %v1812
    %1814 = vmatmul.bf16.gmra.mxu0 %v654
    %v1815 = vpop.f32.mrf.mxu0
    %v1816 = vadd.f32 %v1767, %v1815
    %v1817 = vpop.f32.mrf.mxu0
    %v1818 = vadd.f32 %v1769, %v1817
    %1819 = vmatmul.bf16.gmra.mxu0 %v658
    %v1820 = vpop.f32.mrf.mxu0
    %v1821 = vadd.f32 %v1772, %v1820
    %v1822 = vpop.f32.mrf.mxu0
    %v1823 = vadd.f32 %v1774, %v1822
    %1824 = vmatmul.bf16.gmra.mxu0 %v662
    %v1825 = vpop.f32.mrf.mxu0
    %v1826 = vadd.f32 %v1777, %v1825
    %v1827 = vpop.f32.mrf.mxu0
    %v1828 = vadd.f32 %v1779, %v1827
    %1829 = vmatmul.bf16.gmra.mxu0 %v666
    %v1830 = vpop.f32.mrf.mxu0
    %v1831 = vadd.f32 %v1782, %v1830
    %v1832 = vpop.f32.mrf.mxu0
    %v1833 = vadd.f32 %v1784, %v1832
    %1834 = vmatmul.bf16.gmra.mxu0 %v670
    %v1835 = vpop.f32.mrf.mxu0
    %v1836 = vadd.f32 %v1787, %v1835
    %v1837 = vpop.f32.mrf.mxu0
    %v1838 = vadd.f32 %v1789, %v1837
    %1839 = vmatmul.bf16.gmra.mxu0 %v674
    %v1840 = vpop.f32.mrf.mxu0
    %v1841 = vadd.f32 %v1792, %v1840
    %v1842 = vpop.f32.mrf.mxu0
    %v1843 = vadd.f32 %v1794, %v1842
    %1844 = vdwg.mxu0
    %1845 = vmatpush.bf16.msra.mxu0 %v1227
    %1846 = vmatpush.bf16.msra.mxu0 %v1223
    %1847 = vmatpush.bf16.msra.mxu0 %v1219
    %1848 = vmatpush.bf16.msra.mxu0 %v1215
    %1849 = vmatpush.bf16.msra.mxu0 %v1211
    %1850 = vmatpush.bf16.msra.mxu0 %v1207
    %1851 = vmatpush.bf16.msra.mxu0 %v1203
    %1852 = vmatpush.bf16.msra.mxu0 %v1199
    %1853 = vmatmul.bf16.gmra.mxu0 %v643
    %v1854 = vpop.f32.mrf.mxu0
    %v1855 = vadd.f32 %v807, %v1854
    %v1856 = vpop.f32.mrf.mxu0
    %v1857 = vadd.f32 %v807, %v1856
    %1858 = vmatmul.bf16.gmra.mxu0 %v647
    %v1859 = vpop.f32.mrf.mxu0
    %v1860 = vadd.f32 %v807, %v1859
    %v1861 = vpop.f32.mrf.mxu0
    %v1862 = vadd.f32 %v807, %v1861
    %1863 = vmatmul.bf16.gmra.mxu0 %v651
    %v1864 = vpop.f32.mrf.mxu0
    %v1865 = vadd.f32 %v807, %v1864
    %v1866 = vpop.f32.mrf.mxu0
    %v1867 = vadd.f32 %v807, %v1866
    %1868 = vmatmul.bf16.gmra.mxu0 %v655
    %v1869 = vpop.f32.mrf.mxu0
    %v1870 = vadd.f32 %v807, %v1869
    %v1871 = vpop.f32.mrf.mxu0
    %v1872 = vadd.f32 %v807, %v1871
    %1873 = vmatmul.bf16.gmra.mxu0 %v659
    %v1874 = vpop.f32.mrf.mxu0
    %v1875 = vadd.f32 %v807, %v1874
    %v1876 = vpop.f32.mrf.mxu0
    %v1877 = vadd.f32 %v807, %v1876
    %1878 = vmatmul.bf16.gmra.mxu0 %v663
    %v1879 = vpop.f32.mrf.mxu0
    %v1880 = vadd.f32 %v807, %v1879
    %v1881 = vpop.f32.mrf.mxu0
    %v1882 = vadd.f32 %v807, %v1881
    %1883 = vmatmul.bf16.gmra.mxu0 %v667
    %v1884 = vpop.f32.mrf.mxu0
    %v1885 = vadd.f32 %v807, %v1884
    %v1886 = vpop.f32.mrf.mxu0
    %v1887 = vadd.f32 %v807, %v1886
    %1888 = vmatmul.bf16.gmra.mxu0 %v671
    %v1889 = vpop.f32.mrf.mxu0
    %v1890 = vadd.f32 %v807, %v1889
    %v1891 = vpop.f32.mrf.mxu0
    %v1892 = vadd.f32 %v807, %v1891
    %1893 = vdwg.mxu0
    %1894 = vmatpush.bf16.msra.mxu0 %v1259
    %1895 = vmatpush.bf16.msra.mxu0 %v1255
    %1896 = vmatpush.bf16.msra.mxu0 %v1251
    %1897 = vmatpush.bf16.msra.mxu0 %v1247
    %1898 = vmatpush.bf16.msra.mxu0 %v1243
    %1899 = vmatpush.bf16.msra.mxu0 %v1239
    %1900 = vmatpush.bf16.msra.mxu0 %v1235
    %1901 = vmatpush.bf16.msra.mxu0 %v1231
    %1902 = vmatmul.bf16.gmra.mxu0 %v644
    %v1903 = vpop.f32.mrf.mxu0
    %v1904 = vadd.f32 %v1855, %v1903
    %v1905 = vpop.f32.mrf.mxu0
    %v1906 = vadd.f32 %v1857, %v1905
    %1907 = vmatmul.bf16.gmra.mxu0 %v648
    %v1908 = vpop.f32.mrf.mxu0
    %v1909 = vadd.f32 %v1860, %v1908
    %v1910 = vpop.f32.mrf.mxu0
    %v1911 = vadd.f32 %v1862, %v1910
    %1912 = vmatmul.bf16.gmra.mxu0 %v652
    %v1913 = vpop.f32.mrf.mxu0
    %v1914 = vadd.f32 %v1865, %v1913
    %v1915 = vpop.f32.mrf.mxu0
    %v1916 = vadd.f32 %v1867, %v1915
    %1917 = vmatmul.bf16.gmra.mxu0 %v656
    %v1918 = vpop.f32.mrf.mxu0
    %v1919 = vadd.f32 %v1870, %v1918
    %v1920 = vpop.f32.mrf.mxu0
    %v1921 = vadd.f32 %v1872, %v1920
    %1922 = vmatmul.bf16.gmra.mxu0 %v660
    %v1923 = vpop.f32.mrf.mxu0
    %v1924 = vadd.f32 %v1875, %v1923
    %v1925 = vpop.f32.mrf.mxu0
    %v1926 = vadd.f32 %v1877, %v1925
    %1927 = vmatmul.bf16.gmra.mxu0 %v664
    %v1928 = vpop.f32.mrf.mxu0
    %v1929 = vadd.f32 %v1880, %v1928
    %v1930 = vpop.f32.mrf.mxu0
    %v1931 = vadd.f32 %v1882, %v1930
    %1932 = vmatmul.bf16.gmra.mxu0 %v668
    %v1933 = vpop.f32.mrf.mxu0
    %v1934 = vadd.f32 %v1885, %v1933
    %v1935 = vpop.f32.mrf.mxu0
    %v1936 = vadd.f32 %v1887, %v1935
    %1937 = vmatmul.bf16.gmra.mxu0 %v672
    %v1938 = vpop.f32.mrf.mxu0
    %v1939 = vadd.f32 %v1890, %v1938
    %v1940 = vpop.f32.mrf.mxu0
    %v1941 = vadd.f32 %v1892, %v1940
    %1942 = vdwg.mxu0
    %1943 = vmatpush.bf16.msra.mxu0 %v1291
    %1944 = vmatpush.bf16.msra.mxu0 %v1287
    %1945 = vmatpush.bf16.msra.mxu0 %v1283
    %1946 = vmatpush.bf16.msra.mxu0 %v1279
    %1947 = vmatpush.bf16.msra.mxu0 %v1275
    %1948 = vmatpush.bf16.msra.mxu0 %v1271
    %1949 = vmatpush.bf16.msra.mxu0 %v1267
    %1950 = vmatpush.bf16.msra.mxu0 %v1263
    %1951 = vmatmul.bf16.gmra.mxu0 %v645
    %v1952 = vpop.f32.mrf.mxu0
    %v1953 = vadd.f32 %v1904, %v1952
    %v1954 = vpop.f32.mrf.mxu0
    %v1955 = vadd.f32 %v1906, %v1954
    %1956 = vmatmul.bf16.gmra.mxu0 %v649
    %v1957 = vpop.f32.mrf.mxu0
    %v1958 = vadd.f32 %v1909, %v1957
    %v1959 = vpop.f32.mrf.mxu0
    %v1960 = vadd.f32 %v1911, %v1959
    %1961 = vmatmul.bf16.gmra.mxu0 %v653
    %v1962 = vpop.f32.mrf.mxu0
    %v1963 = vadd.f32 %v1914, %v1962
    %v1964 = vpop.f32.mrf.mxu0
    %v1965 = vadd.f32 %v1916, %v1964
    %1966 = vmatmul.bf16.gmra.mxu0 %v657
    %v1967 = vpop.f32.mrf.mxu0
    %v1968 = vadd.f32 %v1919, %v1967
    %v1969 = vpop.f32.mrf.mxu0
    %v1970 = vadd.f32 %v1921, %v1969
    %1971 = vmatmul.bf16.gmra.mxu0 %v661
    %v1972 = vpop.f32.mrf.mxu0
    %v1973 = vadd.f32 %v1924, %v1972
    %v1974 = vpop.f32.mrf.mxu0
    %v1975 = vadd.f32 %v1926, %v1974
    %1976 = vmatmul.bf16.gmra.mxu0 %v665
    %v1977 = vpop.f32.mrf.mxu0
    %v1978 = vadd.f32 %v1929, %v1977
    %v1979 = vpop.f32.mrf.mxu0
    %v1980 = vadd.f32 %v1931, %v1979
    %1981 = vmatmul.bf16.gmra.mxu0 %v669
    %v1982 = vpop.f32.mrf.mxu0
    %v1983 = vadd.f32 %v1934, %v1982
    %v1984 = vpop.f32.mrf.mxu0
    %v1985 = vadd.f32 %v1936, %v1984
    %1986 = vmatmul.bf16.gmra.mxu0 %v673
    %v1987 = vpop.f32.mrf.mxu0
    %v1988 = vadd.f32 %v1939, %v1987
    %v1989 = vpop.f32.mrf.mxu0
    %v1990 = vadd.f32 %v1941, %v1989
    %1991 = vdwg.mxu0
    %1992 = vmatpush.bf16.msra.mxu0 %v1323
    %1993 = vmatpush.bf16.msra.mxu0 %v1319
    %1994 = vmatpush.bf16.msra.mxu0 %v1315
    %1995 = vmatpush.bf16.msra.mxu0 %v1311
    %1996 = vmatpush.bf16.msra.mxu0 %v1307
    %1997 = vmatpush.bf16.msra.mxu0 %v1303
    %1998 = vmatpush.bf16.msra.mxu0 %v1299
    %1999 = vmatpush.bf16.msra.mxu0 %v1295
    %2000 = vmatmul.bf16.gmra.mxu0 %v646
    %v2001 = vpop.f32.mrf.mxu0
    %v2002 = vadd.f32 %v1953, %v2001
    %v2003 = vpop.f32.mrf.mxu0
    %v2004 = vadd.f32 %v1955, %v2003
    %2005 = vmatmul.bf16.gmra.mxu0 %v650
    %v2006 = vpop.f32.mrf.mxu0
    %v2007 = vadd.f32 %v1958, %v2006
    %v2008 = vpop.f32.mrf.mxu0
    %v2009 = vadd.f32 %v1960, %v2008
    %2010 = vmatmul.bf16.gmra.mxu0 %v654
    %v2011 = vpop.f32.mrf.mxu0
    %v2012 = vadd.f32 %v1963, %v2011
    %v2013 = vpop.f32.mrf.mxu0
    %v2014 = vadd.f32 %v1965, %v2013
    %2015 = vmatmul.bf16.gmra.mxu0 %v658
    %v2016 = vpop.f32.mrf.mxu0
    %v2017 = vadd.f32 %v1968, %v2016
    %v2018 = vpop.f32.mrf.mxu0
    %v2019 = vadd.f32 %v1970, %v2018
    %2020 = vmatmul.bf16.gmra.mxu0 %v662
    %v2021 = vpop.f32.mrf.mxu0
    %v2022 = vadd.f32 %v1973, %v2021
    %v2023 = vpop.f32.mrf.mxu0
    %v2024 = vadd.f32 %v1975, %v2023
    %2025 = vmatmul.bf16.gmra.mxu0 %v666
    %v2026 = vpop.f32.mrf.mxu0
    %v2027 = vadd.f32 %v1978, %v2026
    %v2028 = vpop.f32.mrf.mxu0
    %v2029 = vadd.f32 %v1980, %v2028
    %2030 = vmatmul.bf16.gmra.mxu0 %v670
    %v2031 = vpop.f32.mrf.mxu0
    %v2032 = vadd.f32 %v1983, %v2031
    %v2033 = vpop.f32.mrf.mxu0
    %v2034 = vadd.f32 %v1985, %v2033
    %2035 = vmatmul.bf16.gmra.mxu0 %v674
    %v2036 = vpop.f32.mrf.mxu0
    %v2037 = vadd.f32 %v1988, %v2036
    %v2038 = vpop.f32.mrf.mxu0
    %v2039 = vadd.f32 %v1990, %v2038
    %2040 = vdwg.mxu0
    %2041 = vmatpush.bf16.msra.mxu0 %v1228
    %2042 = vmatpush.bf16.msra.mxu0 %v1224
    %2043 = vmatpush.bf16.msra.mxu0 %v1220
    %2044 = vmatpush.bf16.msra.mxu0 %v1216
    %2045 = vmatpush.bf16.msra.mxu0 %v1212
    %2046 = vmatpush.bf16.msra.mxu0 %v1208
    %2047 = vmatpush.bf16.msra.mxu0 %v1204
    %2048 = vmatpush.bf16.msra.mxu0 %v1200
    %2049 = vmatmul.bf16.gmra.mxu0 %v643
    %v2050 = vpop.f32.mrf.mxu0
    %v2051 = vadd.f32 %v808, %v2050
    %v2052 = vpop.f32.mrf.mxu0
    %v2053 = vadd.f32 %v808, %v2052
    %2054 = vmatmul.bf16.gmra.mxu0 %v647
    %v2055 = vpop.f32.mrf.mxu0
    %v2056 = vadd.f32 %v808, %v2055
    %v2057 = vpop.f32.mrf.mxu0
    %v2058 = vadd.f32 %v808, %v2057
    %2059 = vmatmul.bf16.gmra.mxu0 %v651
    %v2060 = vpop.f32.mrf.mxu0
    %v2061 = vadd.f32 %v808, %v2060
    %v2062 = vpop.f32.mrf.mxu0
    %v2063 = vadd.f32 %v808, %v2062
    %2064 = vmatmul.bf16.gmra.mxu0 %v655
    %v2065 = vpop.f32.mrf.mxu0
    %v2066 = vadd.f32 %v808, %v2065
    %v2067 = vpop.f32.mrf.mxu0
    %v2068 = vadd.f32 %v808, %v2067
    %2069 = vmatmul.bf16.gmra.mxu0 %v659
    %v2070 = vpop.f32.mrf.mxu0
    %v2071 = vadd.f32 %v808, %v2070
    %v2072 = vpop.f32.mrf.mxu0
    %v2073 = vadd.f32 %v808, %v2072
    %2074 = vmatmul.bf16.gmra.mxu0 %v663
    %v2075 = vpop.f32.mrf.mxu0
    %v2076 = vadd.f32 %v808, %v2075
    %v2077 = vpop.f32.mrf.mxu0
    %v2078 = vadd.f32 %v808, %v2077
    %2079 = vmatmul.bf16.gmra.mxu0 %v667
    %v2080 = vpop.f32.mrf.mxu0
    %v2081 = vadd.f32 %v808, %v2080
    %v2082 = vpop.f32.mrf.mxu0
    %v2083 = vadd.f32 %v808, %v2082
    %2084 = vmatmul.bf16.gmra.mxu0 %v671
    %v2085 = vpop.f32.mrf.mxu0
    %v2086 = vadd.f32 %v808, %v2085
    %v2087 = vpop.f32.mrf.mxu0
    %v2088 = vadd.f32 %v808, %v2087
    %2089 = vdwg.mxu0
    %2090 = vmatpush.bf16.msra.mxu0 %v1260
    %2091 = vmatpush.bf16.msra.mxu0 %v1256
    %2092 = vmatpush.bf16.msra.mxu0 %v1252
    %2093 = vmatpush.bf16.msra.mxu0 %v1248
    %2094 = vmatpush.bf16.msra.mxu0 %v1244
    %2095 = vmatpush.bf16.msra.mxu0 %v1240
    %2096 = vmatpush.bf16.msra.mxu0 %v1236
    %2097 = vmatpush.bf16.msra.mxu0 %v1232
    %2098 = vmatmul.bf16.gmra.mxu0 %v644
    %v2099 = vpop.f32.mrf.mxu0
    %v2100 = vadd.f32 %v2051, %v2099
    %v2101 = vpop.f32.mrf.mxu0
    %v2102 = vadd.f32 %v2053, %v2101
    %2103 = vmatmul.bf16.gmra.mxu0 %v648
    %v2104 = vpop.f32.mrf.mxu0
    %v2105 = vadd.f32 %v2056, %v2104
    %v2106 = vpop.f32.mrf.mxu0
    %v2107 = vadd.f32 %v2058, %v2106
    %2108 = vmatmul.bf16.gmra.mxu0 %v652
    %v2109 = vpop.f32.mrf.mxu0
    %v2110 = vadd.f32 %v2061, %v2109
    %v2111 = vpop.f32.mrf.mxu0
    %v2112 = vadd.f32 %v2063, %v2111
    %2113 = vmatmul.bf16.gmra.mxu0 %v656
    %v2114 = vpop.f32.mrf.mxu0
    %v2115 = vadd.f32 %v2066, %v2114
    %v2116 = vpop.f32.mrf.mxu0
    %v2117 = vadd.f32 %v2068, %v2116
    %2118 = vmatmul.bf16.gmra.mxu0 %v660
    %v2119 = vpop.f32.mrf.mxu0
    %v2120 = vadd.f32 %v2071, %v2119
    %v2121 = vpop.f32.mrf.mxu0
    %v2122 = vadd.f32 %v2073, %v2121
    %2123 = vmatmul.bf16.gmra.mxu0 %v664
    %v2124 = vpop.f32.mrf.mxu0
    %v2125 = vadd.f32 %v2076, %v2124
    %v2126 = vpop.f32.mrf.mxu0
    %v2127 = vadd.f32 %v2078, %v2126
    %2128 = vmatmul.bf16.gmra.mxu0 %v668
    %v2129 = vpop.f32.mrf.mxu0
    %v2130 = vadd.f32 %v2081, %v2129
    %v2131 = vpop.f32.mrf.mxu0
    %v2132 = vadd.f32 %v2083, %v2131
    %2133 = vmatmul.bf16.gmra.mxu0 %v672
    %v2134 = vpop.f32.mrf.mxu0
    %v2135 = vadd.f32 %v2086, %v2134
    %v2136 = vpop.f32.mrf.mxu0
    %v2137 = vadd.f32 %v2088, %v2136
    %2138 = vdwg.mxu0
    %2139 = vmatpush.bf16.msra.mxu0 %v1292
    %2140 = vmatpush.bf16.msra.mxu0 %v1288
    %2141 = vmatpush.bf16.msra.mxu0 %v1284
    %2142 = vmatpush.bf16.msra.mxu0 %v1280
    %2143 = vmatpush.bf16.msra.mxu0 %v1276
    %2144 = vmatpush.bf16.msra.mxu0 %v1272
    %2145 = vmatpush.bf16.msra.mxu0 %v1268
    %2146 = vmatpush.bf16.msra.mxu0 %v1264
    %2147 = vmatmul.bf16.gmra.mxu0 %v645
    %v2148 = vpop.f32.mrf.mxu0
    %v2149 = vadd.f32 %v2100, %v2148
    %v2150 = vpop.f32.mrf.mxu0
    %v2151 = vadd.f32 %v2102, %v2150
    %2152 = vmatmul.bf16.gmra.mxu0 %v649
    %v2153 = vpop.f32.mrf.mxu0
    %v2154 = vadd.f32 %v2105, %v2153
    %v2155 = vpop.f32.mrf.mxu0
    %v2156 = vadd.f32 %v2107, %v2155
    %2157 = vmatmul.bf16.gmra.mxu0 %v653
    %v2158 = vpop.f32.mrf.mxu0
    %v2159 = vadd.f32 %v2110, %v2158
    %v2160 = vpop.f32.mrf.mxu0
    %v2161 = vadd.f32 %v2112, %v2160
    %2162 = vmatmul.bf16.gmra.mxu0 %v657
    %v2163 = vpop.f32.mrf.mxu0
    %v2164 = vadd.f32 %v2115, %v2163
    %v2165 = vpop.f32.mrf.mxu0
    %v2166 = vadd.f32 %v2117, %v2165
    %2167 = vmatmul.bf16.gmra.mxu0 %v661
    %v2168 = vpop.f32.mrf.mxu0
    %v2169 = vadd.f32 %v2120, %v2168
    %v2170 = vpop.f32.mrf.mxu0
    %v2171 = vadd.f32 %v2122, %v2170
    %2172 = vmatmul.bf16.gmra.mxu0 %v665
    %v2173 = vpop.f32.mrf.mxu0
    %v2174 = vadd.f32 %v2125, %v2173
    %v2175 = vpop.f32.mrf.mxu0
    %v2176 = vadd.f32 %v2127, %v2175
    %2177 = vmatmul.bf16.gmra.mxu0 %v669
    %v2178 = vpop.f32.mrf.mxu0
    %v2179 = vadd.f32 %v2130, %v2178
    %v2180 = vpop.f32.mrf.mxu0
    %v2181 = vadd.f32 %v2132, %v2180
    %2182 = vmatmul.bf16.gmra.mxu0 %v673
    %v2183 = vpop.f32.mrf.mxu0
    %v2184 = vadd.f32 %v2135, %v2183
    %v2185 = vpop.f32.mrf.mxu0
    %v2186 = vadd.f32 %v2137, %v2185
    %2187 = vdwg.mxu0
    %2188 = vmatpush.bf16.msra.mxu0 %v1324
    %2189 = vmatpush.bf16.msra.mxu0 %v1320
    %2190 = vmatpush.bf16.msra.mxu0 %v1316
    %2191 = vmatpush.bf16.msra.mxu0 %v1312
    %2192 = vmatpush.bf16.msra.mxu0 %v1308
    %2193 = vmatpush.bf16.msra.mxu0 %v1304
    %2194 = vmatpush.bf16.msra.mxu0 %v1300
    %2195 = vmatpush.bf16.msra.mxu0 %v1296
    %2196 = vmatmul.bf16.gmra.mxu0 %v646
    %v2197 = vpop.f32.mrf.mxu0
    %v2198 = vadd.f32 %v2149, %v2197
    %v2199 = vpop.f32.mrf.mxu0
    %v2200 = vadd.f32 %v2151, %v2199
    %2201 = vmatmul.bf16.gmra.mxu0 %v650
    %v2202 = vpop.f32.mrf.mxu0
    %v2203 = vadd.f32 %v2154, %v2202
    %v2204 = vpop.f32.mrf.mxu0
    %v2205 = vadd.f32 %v2156, %v2204
    %2206 = vmatmul.bf16.gmra.mxu0 %v654
    %v2207 = vpop.f32.mrf.mxu0
    %v2208 = vadd.f32 %v2159, %v2207
    %v2209 = vpop.f32.mrf.mxu0
    %v2210 = vadd.f32 %v2161, %v2209
    %2211 = vmatmul.bf16.gmra.mxu0 %v658
    %v2212 = vpop.f32.mrf.mxu0
    %v2213 = vadd.f32 %v2164, %v2212
    %v2214 = vpop.f32.mrf.mxu0
    %v2215 = vadd.f32 %v2166, %v2214
    %2216 = vmatmul.bf16.gmra.mxu0 %v662
    %v2217 = vpop.f32.mrf.mxu0
    %v2218 = vadd.f32 %v2169, %v2217
    %v2219 = vpop.f32.mrf.mxu0
    %v2220 = vadd.f32 %v2171, %v2219
    %2221 = vmatmul.bf16.gmra.mxu0 %v666
    %v2222 = vpop.f32.mrf.mxu0
    %v2223 = vadd.f32 %v2174, %v2222
    %v2224 = vpop.f32.mrf.mxu0
    %v2225 = vadd.f32 %v2176, %v2224
    %2226 = vmatmul.bf16.gmra.mxu0 %v670
    %v2227 = vpop.f32.mrf.mxu0
    %v2228 = vadd.f32 %v2179, %v2227
    %v2229 = vpop.f32.mrf.mxu0
    %v2230 = vadd.f32 %v2181, %v2229
    %2231 = vmatmul.bf16.gmra.mxu0 %v674
    %v2232 = vpop.f32.mrf.mxu0
    %v2233 = vadd.f32 %v2184, %v2232
    %v2234 = vpop.f32.mrf.mxu0
    %v2235 = vadd.f32 %v2186, %v2234
    %2236 = vdwg.mxu0
    %v2237 = vmax.f32 %v1610, 0.0
    %v2238 = vmax.f32 %v1806, 0.0
    %v2239 = vmax.f32 %v2002, 0.0
    %v2240 = vmax.f32 %v2198, 0.0
    %v2241 = vmax.f32 %v1612, 0.0
    %v2242 = vmax.f32 %v1808, 0.0
    %v2243 = vmax.f32 %v2004, 0.0
    %v2244 = vmax.f32 %v2200, 0.0
    %v2245 = vmax.f32 %v1615, 0.0
    %v2246 = vmax.f32 %v1811, 0.0
    %v2247 = vmax.f32 %v2007, 0.0
    %v2248 = vmax.f32 %v2203, 0.0
    %v2249 = vmax.f32 %v1617, 0.0
    %v2250 = vmax.f32 %v1813, 0.0
    %v2251 = vmax.f32 %v2009, 0.0
    %v2252 = vmax.f32 %v2205, 0.0
    %v2253 = vmax.f32 %v1620, 0.0
    %v2254 = vmax.f32 %v1816, 0.0
    %v2255 = vmax.f32 %v2012, 0.0
    %v2256 = vmax.f32 %v2208, 0.0
    %v2257 = vmax.f32 %v1622, 0.0
    %v2258 = vmax.f32 %v1818, 0.0
    %v2259 = vmax.f32 %v2014, 0.0
    %v2260 = vmax.f32 %v2210, 0.0
    %v2261 = vmax.f32 %v1625, 0.0
    %v2262 = vmax.f32 %v1821, 0.0
    %v2263 = vmax.f32 %v2017, 0.0
    %v2264 = vmax.f32 %v2213, 0.0
    %v2265 = vmax.f32 %v1627, 0.0
    %v2266 = vmax.f32 %v1823, 0.0
    %v2267 = vmax.f32 %v2019, 0.0
    %v2268 = vmax.f32 %v2215, 0.0
    %v2269 = vmax.f32 %v1630, 0.0
    %v2270 = vmax.f32 %v1826, 0.0
    %v2271 = vmax.f32 %v2022, 0.0
    %v2272 = vmax.f32 %v2218, 0.0
    %v2273 = vmax.f32 %v1632, 0.0
    %v2274 = vmax.f32 %v1828, 0.0
    %v2275 = vmax.f32 %v2024, 0.0
    %v2276 = vmax.f32 %v2220, 0.0
    %v2277 = vmax.f32 %v1635, 0.0
    %v2278 = vmax.f32 %v1831, 0.0
    %v2279 = vmax.f32 %v2027, 0.0
    %v2280 = vmax.f32 %v2223, 0.0
    %v2281 = vmax.f32 %v1637, 0.0
    %v2282 = vmax.f32 %v1833, 0.0
    %v2283 = vmax.f32 %v2029, 0.0
    %v2284 = vmax.f32 %v2225, 0.0
    %v2285 = vmax.f32 %v1640, 0.0
    %v2286 = vmax.f32 %v1836, 0.0
    %v2287 = vmax.f32 %v2032, 0.0
    %v2288 = vmax.f32 %v2228, 0.0
    %v2289 = vmax.f32 %v1642, 0.0
    %v2290 = vmax.f32 %v1838, 0.0
    %v2291 = vmax.f32 %v2034, 0.0
    %v2292 = vmax.f32 %v2230, 0.0
    %v2293 = vmax.f32 %v1645, 0.0
    %v2294 = vmax.f32 %v1841, 0.0
    %v2295 = vmax.f32 %v2037, 0.0
    %v2296 = vmax.f32 %v2233, 0.0
    %v2297 = vmax.f32 %v1647, 0.0
    %v2298 = vmax.f32 %v1843, 0.0
    %v2299 = vmax.f32 %v2039, 0.0
    %v2300 = vmax.f32 %v2235, 0.0
    %v2301 = vpack.c.bf16 %v2241, %v2237
    %v2302 = vpack.c.bf16 %v2242, %v2238
    %v2303 = vpack.c.bf16 %v2243, %v2239
    %v2304 = vpack.c.bf16 %v2244, %v2240
    %v2305 = vpack.c.bf16 %v2249, %v2245
    %v2306 = vpack.c.bf16 %v2250, %v2246
    %v2307 = vpack.c.bf16 %v2251, %v2247
    %v2308 = vpack.c.bf16 %v2252, %v2248
    %v2309 = vpack.c.bf16 %v2257, %v2253
    %v2310 = vpack.c.bf16 %v2258, %v2254
    %v2311 = vpack.c.bf16 %v2259, %v2255
    %v2312 = vpack.c.bf16 %v2260, %v2256
    %v2313 = vpack.c.bf16 %v2265, %v2261
    %v2314 = vpack.c.bf16 %v2266, %v2262
    %v2315 = vpack.c.bf16 %v2267, %v2263
    %v2316 = vpack.c.bf16 %v2268, %v2264
    %v2317 = vpack.c.bf16 %v2273, %v2269
    %v2318 = vpack.c.bf16 %v2274, %v2270
    %v2319 = vpack.c.bf16 %v2275, %v2271
    %v2320 = vpack.c.bf16 %v2276, %v2272
    %v2321 = vpack.c.bf16 %v2281, %v2277
    %v2322 = vpack.c.bf16 %v2282, %v2278
    %v2323 = vpack.c.bf16 %v2283, %v2279
    %v2324 = vpack.c.bf16 %v2284, %v2280
    %v2325 = vpack.c.bf16 %v2289, %v2285
    %v2326 = vpack.c.bf16 %v2290, %v2286
    %v2327 = vpack.c.bf16 %v2291, %v2287
    %v2328 = vpack.c.bf16 %v2292, %v2288
    %v2329 = vpack.c.bf16 %v2297, %v2293
    %v2330 = vpack.c.bf16 %v2298, %v2294
    %v2331 = vpack.c.bf16 %v2299, %v2295
    %v2332 = vpack.c.bf16 %v2300, %v2296
    %v2333 = vld [vmem:[#allocation11] sm:$0xf]
    %v2334 = vld [vmem:[#allocation11 + $0x4] sm:$0xf]
    %v2335 = vld [vmem:[#allocation11 + $0x8] sm:$0xf]
    %v2336 = vld [vmem:[#allocation11 + $0xc] sm:$0xf]
    %v2337 = vld [vmem:[#allocation11 + $0x10] sm:$0xf]
    %v2338 = vld [vmem:[#allocation11 + $0x14] sm:$0xf]
    %v2339 = vld [vmem:[#allocation11 + $0x18] sm:$0xf]
    %v2340 = vld [vmem:[#allocation11 + $0x1c] sm:$0xf]
    %v2341 = vld [vmem:[#allocation11 + $0x20] sm:$0xf]
    %v2342 = vld [vmem:[#allocation11 + $0x24] sm:$0xf]
    %v2343 = vld [vmem:[#allocation11 + $0x28] sm:$0xf]
    %v2344 = vld [vmem:[#allocation11 + $0x2c] sm:$0xf]
    %v2345 = vld [vmem:[#allocation11 + $0x30] sm:$0xf]
    %v2346 = vld [vmem:[#allocation11 + $0x34] sm:$0xf]
    %v2347 = vld [vmem:[#allocation11 + $0x38] sm:$0xf]
    %v2348 = vld [vmem:[#allocation11 + $0x3c] sm:$0xf]
    %v2349 = vld [vmem:[#allocation11 + $0x40] sm:$0xf]
    %v2350 = vld [vmem:[#allocation11 + $0x44] sm:$0xf]
    %v2351 = vld [vmem:[#allocation11 + $0x48] sm:$0xf]
    %v2352 = vld [vmem:[#allocation11 + $0x4c] sm:$0xf]
    %v2353 = vld [vmem:[#allocation11 + $0x50] sm:$0xf]
    %v2354 = vld [vmem:[#allocation11 + $0x54] sm:$0xf]
    %v2355 = vld [vmem:[#allocation11 + $0x58] sm:$0xf]
    %v2356 = vld [vmem:[#allocation11 + $0x5c] sm:$0xf]
    %v2357 = vld [vmem:[#allocation11 + $0x60] sm:$0xf]
    %v2358 = vld [vmem:[#allocation11 + $0x64] sm:$0xf]
    %v2359 = vld [vmem:[#allocation11 + $0x68] sm:$0xf]
    %v2360 = vld [vmem:[#allocation11 + $0x6c] sm:$0xf]
    %v2361 = vld [vmem:[#allocation11 + $0x70] sm:$0xf]
    %v2362 = vld [vmem:[#allocation11 + $0x74] sm:$0xf]
    %v2363 = vld [vmem:[#allocation11 + $0x78] sm:$0xf]
    %v2364 = vld [vmem:[#allocation11 + $0x7c] sm:$0xf]
    %v2365 = vld [vmem:[#allocation11 + $0x80] sm:$0xf]
    %v2366 = vld [vmem:[#allocation11 + $0x84] sm:$0xf]
    %v2367 = vld [vmem:[#allocation11 + $0x88] sm:$0xf]
    %v2368 = vld [vmem:[#allocation11 + $0x8c] sm:$0xf]
    %v2369 = vld [vmem:[#allocation11 + $0x90] sm:$0xf]
    %v2370 = vld [vmem:[#allocation11 + $0x94] sm:$0xf]
    %v2371 = vld [vmem:[#allocation11 + $0x98] sm:$0xf]
    %v2372 = vld [vmem:[#allocation11 + $0x9c] sm:$0xf]
    %v2373 = vld [vmem:[#allocation11 + $0xa0] sm:$0xf]
    %v2374 = vld [vmem:[#allocation11 + $0xa4] sm:$0xf]
    %v2375 = vld [vmem:[#allocation11 + $0xa8] sm:$0xf]
    %v2376 = vld [vmem:[#allocation11 + $0xac] sm:$0xf]
    %v2377 = vld [vmem:[#allocation11 + $0xb0] sm:$0xf]
    %v2378 = vld [vmem:[#allocation11 + $0xb4] sm:$0xf]
    %v2379 = vld [vmem:[#allocation11 + $0xb8] sm:$0xf]
    %v2380 = vld [vmem:[#allocation11 + $0xbc] sm:$0xf]
    %v2381 = vld [vmem:[#allocation11 + $0xc0] sm:$0xf]
    %v2382 = vld [vmem:[#allocation11 + $0xc4] sm:$0xf]
    %v2383 = vld [vmem:[#allocation11 + $0xc8] sm:$0xf]
    %v2384 = vld [vmem:[#allocation11 + $0xcc] sm:$0xf]
    %v2385 = vld [vmem:[#allocation11 + $0xd0] sm:$0xf]
    %v2386 = vld [vmem:[#allocation11 + $0xd4] sm:$0xf]
    %v2387 = vld [vmem:[#allocation11 + $0xd8] sm:$0xf]
    %v2388 = vld [vmem:[#allocation11 + $0xdc] sm:$0xf]
    %v2389 = vld [vmem:[#allocation11 + $0xe0] sm:$0xf]
    %v2390 = vld [vmem:[#allocation11 + $0xe4] sm:$0xf]
    %v2391 = vld [vmem:[#allocation11 + $0xe8] sm:$0xf]
    %v2392 = vld [vmem:[#allocation11 + $0xec] sm:$0xf]
    %v2393 = vld [vmem:[#allocation11 + $0xf0] sm:$0xf]
    %v2394 = vld [vmem:[#allocation11 + $0xf4] sm:$0xf]
    %v2395 = vld [vmem:[#allocation11 + $0xf8] sm:$0xf]
    %v2396 = vld [vmem:[#allocation11 + $0xfc] sm:$0xf]
    %v2397 = vld [vmem:[%s6] sm:$0x1]
    %v2399 = vperm.slane %v2397, 0
    %v2465 = vunpack.c.l.b16 %v2333
    %v2466 = vunpack.c.l.b16 %v2334
    %v2467 = vunpack.c.l.b16 %v2335
    %v2468 = vunpack.c.l.b16 %v2336
    %v2469 = vunpack.c.l.b16 %v2337
    %v2470 = vunpack.c.l.b16 %v2338
    %v2471 = vunpack.c.l.b16 %v2339
    %v2472 = vunpack.c.l.b16 %v2340
    %v2473 = vunpack.c.l.b16 %v2341
    %v2474 = vunpack.c.l.b16 %v2342
    %v2475 = vunpack.c.l.b16 %v2343
    %v2476 = vunpack.c.l.b16 %v2344
    %v2477 = vunpack.c.l.b16 %v2345
    %v2478 = vunpack.c.l.b16 %v2346
    %v2479 = vunpack.c.l.b16 %v2347
    %v2480 = vunpack.c.l.b16 %v2348
    %v2481 = vunpack.c.l.b16 %v2349
    %v2482 = vunpack.c.l.b16 %v2350
    %v2483 = vunpack.c.l.b16 %v2351
    %v2484 = vunpack.c.l.b16 %v2352
    %v2485 = vunpack.c.l.b16 %v2353
    %v2486 = vunpack.c.l.b16 %v2354
    %v2487 = vunpack.c.l.b16 %v2355
    %v2488 = vunpack.c.l.b16 %v2356
    %v2489 = vunpack.c.l.b16 %v2357
    %v2490 = vunpack.c.l.b16 %v2358
    %v2491 = vunpack.c.l.b16 %v2359
    %v2492 = vunpack.c.l.b16 %v2360
    %v2493 = vunpack.c.l.b16 %v2361
    %v2494 = vunpack.c.l.b16 %v2362
    %v2495 = vunpack.c.l.b16 %v2363
    %v2496 = vunpack.c.l.b16 %v2364
    %v2497 = vunpack.c.l.b16 %v2365
    %v2498 = vunpack.c.l.b16 %v2366
    %v2499 = vunpack.c.l.b16 %v2367
    %v2500 = vunpack.c.l.b16 %v2368
    %v2501 = vunpack.c.l.b16 %v2369
    %v2502 = vunpack.c.l.b16 %v2370
    %v2503 = vunpack.c.l.b16 %v2371
    %v2504 = vunpack.c.l.b16 %v2372
    %v2505 = vunpack.c.l.b16 %v2373
    %v2506 = vunpack.c.l.b16 %v2374
    %v2507 = vunpack.c.l.b16 %v2375
    %v2508 = vunpack.c.l.b16 %v2376
    %v2509 = vunpack.c.l.b16 %v2377
    %v2510 = vunpack.c.l.b16 %v2378
    %v2511 = vunpack.c.l.b16 %v2379
    %v2512 = vunpack.c.l.b16 %v2380
    %v2513 = vunpack.c.l.b16 %v2381
    %v2514 = vunpack.c.l.b16 %v2382
    %v2515 = vunpack.c.l.b16 %v2383
    %v2516 = vunpack.c.l.b16 %v2384
    %v2517 = vunpack.c.l.b16 %v2385
    %v2518 = vunpack.c.l.b16 %v2386
    %v2519 = vunpack.c.l.b16 %v2387
    %v2520 = vunpack.c.l.b16 %v2388
    %v2521 = vunpack.c.l.b16 %v2389
    %v2522 = vunpack.c.l.b16 %v2390
    %v2523 = vunpack.c.l.b16 %v2391
    %v2524 = vunpack.c.l.b16 %v2392
    %v2525 = vunpack.c.l.b16 %v2393
    %v2526 = vunpack.c.l.b16 %v2394
    %v2527 = vunpack.c.l.b16 %v2395
    %v2528 = vunpack.c.l.b16 %v2396
    %v2529 = vpack.c.b16 %v2466, %v2465
    %v2530 = vpack.c.b16 %v2468, %v2467
    %v2531 = vpack.c.b16 %v2470, %v2469
    %v2532 = vpack.c.b16 %v2472, %v2471
    %v2533 = vpack.c.b16 %v2474, %v2473
    %v2534 = vpack.c.b16 %v2476, %v2475
    %v2535 = vpack.c.b16 %v2478, %v2477
    %v2536 = vpack.c.b16 %v2480, %v2479
    %v2537 = vpack.c.b16 %v2482, %v2481
    %v2538 = vpack.c.b16 %v2484, %v2483
    %v2539 = vpack.c.b16 %v2486, %v2485
    %v2540 = vpack.c.b16 %v2488, %v2487
    %v2541 = vpack.c.b16 %v2490, %v2489
    %v2542 = vpack.c.b16 %v2492, %v2491
    %v2543 = vpack.c.b16 %v2494, %v2493
    %v2544 = vpack.c.b16 %v2496, %v2495
    %v2545 = vpack.c.b16 %v2498, %v2497
    %v2546 = vpack.c.b16 %v2500, %v2499
    %v2547 = vpack.c.b16 %v2502, %v2501
    %v2548 = vpack.c.b16 %v2504, %v2503
    %v2549 = vpack.c.b16 %v2506, %v2505
    %v2550 = vpack.c.b16 %v2508, %v2507
    %v2551 = vpack.c.b16 %v2510, %v2509
    %v2552 = vpack.c.b16 %v2512, %v2511
    %v2553 = vpack.c.b16 %v2514, %v2513
    %v2554 = vpack.c.b16 %v2516, %v2515
    %v2555 = vpack.c.b16 %v2518, %v2517
    %v2556 = vpack.c.b16 %v2520, %v2519
    %v2557 = vpack.c.b16 %v2522, %v2521
    %v2558 = vpack.c.b16 %v2524, %v2523
    %v2559 = vpack.c.b16 %v2526, %v2525
    %v2560 = vpack.c.b16 %v2528, %v2527
    %2593 = vmatpush.bf16.msra.mxu0 %v2536
    %2594 = vmatpush.bf16.msra.mxu0 %v2535
    %2595 = vmatpush.bf16.msra.mxu0 %v2534
    %2596 = vmatpush.bf16.msra.mxu0 %v2533
    %2597 = vmatpush.bf16.msra.mxu0 %v2532
    %2598 = vmatpush.bf16.msra.mxu0 %v2531
    %2599 = vmatpush.bf16.msra.mxu0 %v2530
    %2600 = vmatpush.bf16.msra.mxu0 %v2529
    %2601 = vmatmul.bf16.gmra.mxu0 %v2301
    %v2602 = vpop.f32.mrf.mxu0
    %v2603 = vadd.f32 %v2399, %v2602
    %v2604 = vpop.f32.mrf.mxu0
    %v2605 = vadd.f32 %v2399, %v2604
    %2606 = vmatmul.bf16.gmra.mxu0 %v2305
    %v2607 = vpop.f32.mrf.mxu0
    %v2608 = vadd.f32 %v2399, %v2607
    %v2609 = vpop.f32.mrf.mxu0
    %v2610 = vadd.f32 %v2399, %v2609
    %2611 = vmatmul.bf16.gmra.mxu0 %v2309
    %v2612 = vpop.f32.mrf.mxu0
    %v2613 = vadd.f32 %v2399, %v2612
    %v2614 = vpop.f32.mrf.mxu0
    %v2615 = vadd.f32 %v2399, %v2614
    %2616 = vmatmul.bf16.gmra.mxu0 %v2313
    %v2617 = vpop.f32.mrf.mxu0
    %v2618 = vadd.f32 %v2399, %v2617
    %v2619 = vpop.f32.mrf.mxu0
    %v2620 = vadd.f32 %v2399, %v2619
    %2621 = vmatmul.bf16.gmra.mxu0 %v2317
    %v2622 = vpop.f32.mrf.mxu0
    %v2623 = vadd.f32 %v2399, %v2622
    %v2624 = vpop.f32.mrf.mxu0
    %v2625 = vadd.f32 %v2399, %v2624
    %2626 = vmatmul.bf16.gmra.mxu0 %v2321
    %v2627 = vpop.f32.mrf.mxu0
    %v2628 = vadd.f32 %v2399, %v2627
    %v2629 = vpop.f32.mrf.mxu0
    %v2630 = vadd.f32 %v2399, %v2629
    %2631 = vmatmul.bf16.gmra.mxu0 %v2325
    %v2632 = vpop.f32.mrf.mxu0
    %v2633 = vadd.f32 %v2399, %v2632
    %v2634 = vpop.f32.mrf.mxu0
    %v2635 = vadd.f32 %v2399, %v2634
    %2636 = vmatmul.bf16.gmra.mxu0 %v2329
    %v2637 = vpop.f32.mrf.mxu0
    %v2638 = vadd.f32 %v2399, %v2637
    %v2639 = vpop.f32.mrf.mxu0
    %v2640 = vadd.f32 %v2399, %v2639
    %2641 = vdwg.mxu0
    %2642 = vmatpush.bf16.msra.mxu0 %v2544
    %2643 = vmatpush.bf16.msra.mxu0 %v2543
    %2644 = vmatpush.bf16.msra.mxu0 %v2542
    %2645 = vmatpush.bf16.msra.mxu0 %v2541
    %2646 = vmatpush.bf16.msra.mxu0 %v2540
    %2647 = vmatpush.bf16.msra.mxu0 %v2539
    %2648 = vmatpush.bf16.msra.mxu0 %v2538
    %2649 = vmatpush.bf16.msra.mxu0 %v2537
    %2650 = vmatmul.bf16.gmra.mxu0 %v2302
    %v2651 = vpop.f32.mrf.mxu0
    %v2652 = vadd.f32 %v2603, %v2651
    %v2653 = vpop.f32.mrf.mxu0
    %v2654 = vadd.f32 %v2605, %v2653
    %2655 = vmatmul.bf16.gmra.mxu0 %v2306
    %v2656 = vpop.f32.mrf.mxu0
    %v2657 = vadd.f32 %v2608, %v2656
    %v2658 = vpop.f32.mrf.mxu0
    %v2659 = vadd.f32 %v2610, %v2658
    %2660 = vmatmul.bf16.gmra.mxu0 %v2310
    %v2661 = vpop.f32.mrf.mxu0
    %v2662 = vadd.f32 %v2613, %v2661
    %v2663 = vpop.f32.mrf.mxu0
    %v2664 = vadd.f32 %v2615, %v2663
    %2665 = vmatmul.bf16.gmra.mxu0 %v2314
    %v2666 = vpop.f32.mrf.mxu0
    %v2667 = vadd.f32 %v2618, %v2666
    %v2668 = vpop.f32.mrf.mxu0
    %v2669 = vadd.f32 %v2620, %v2668
    %2670 = vmatmul.bf16.gmra.mxu0 %v2318
    %v2671 = vpop.f32.mrf.mxu0
    %v2672 = vadd.f32 %v2623, %v2671
    %v2673 = vpop.f32.mrf.mxu0
    %v2674 = vadd.f32 %v2625, %v2673
    %2675 = vmatmul.bf16.gmra.mxu0 %v2322
    %v2676 = vpop.f32.mrf.mxu0
    %v2677 = vadd.f32 %v2628, %v2676
    %v2678 = vpop.f32.mrf.mxu0
    %v2679 = vadd.f32 %v2630, %v2678
    %2680 = vmatmul.bf16.gmra.mxu0 %v2326
    %v2681 = vpop.f32.mrf.mxu0
    %v2682 = vadd.f32 %v2633, %v2681
    %v2683 = vpop.f32.mrf.mxu0
    %v2684 = vadd.f32 %v2635, %v2683
    %2685 = vmatmul.bf16.gmra.mxu0 %v2330
    %v2686 = vpop.f32.mrf.mxu0
    %v2687 = vadd.f32 %v2638, %v2686
    %v2688 = vpop.f32.mrf.mxu0
    %v2689 = vadd.f32 %v2640, %v2688
    %2690 = vdwg.mxu0
    %2691 = vmatpush.bf16.msra.mxu0 %v2552
    %2692 = vmatpush.bf16.msra.mxu0 %v2551
    %2693 = vmatpush.bf16.msra.mxu0 %v2550
    %2694 = vmatpush.bf16.msra.mxu0 %v2549
    %2695 = vmatpush.bf16.msra.mxu0 %v2548
    %2696 = vmatpush.bf16.msra.mxu0 %v2547
    %2697 = vmatpush.bf16.msra.mxu0 %v2546
    %2698 = vmatpush.bf16.msra.mxu0 %v2545
    %2699 = vmatmul.bf16.gmra.mxu0 %v2303
    %v2700 = vpop.f32.mrf.mxu0
    %v2701 = vadd.f32 %v2652, %v2700
    %v2702 = vpop.f32.mrf.mxu0
    %v2703 = vadd.f32 %v2654, %v2702
    %2704 = vmatmul.bf16.gmra.mxu0 %v2307
    %v2705 = vpop.f32.mrf.mxu0
    %v2706 = vadd.f32 %v2657, %v2705
    %v2707 = vpop.f32.mrf.mxu0
    %v2708 = vadd.f32 %v2659, %v2707
    %2709 = vmatmul.bf16.gmra.mxu0 %v2311
    %v2710 = vpop.f32.mrf.mxu0
    %v2711 = vadd.f32 %v2662, %v2710
    %v2712 = vpop.f32.mrf.mxu0
    %v2713 = vadd.f32 %v2664, %v2712
    %2714 = vmatmul.bf16.gmra.mxu0 %v2315
    %v2715 = vpop.f32.mrf.mxu0
    %v2716 = vadd.f32 %v2667, %v2715
    %v2717 = vpop.f32.mrf.mxu0
    %v2718 = vadd.f32 %v2669, %v2717
    %2719 = vmatmul.bf16.gmra.mxu0 %v2319
    %v2720 = vpop.f32.mrf.mxu0
    %v2721 = vadd.f32 %v2672, %v2720
    %v2722 = vpop.f32.mrf.mxu0
    %v2723 = vadd.f32 %v2674, %v2722
    %2724 = vmatmul.bf16.gmra.mxu0 %v2323
    %v2725 = vpop.f32.mrf.mxu0
    %v2726 = vadd.f32 %v2677, %v2725
    %v2727 = vpop.f32.mrf.mxu0
    %v2728 = vadd.f32 %v2679, %v2727
    %2729 = vmatmul.bf16.gmra.mxu0 %v2327
    %v2730 = vpop.f32.mrf.mxu0
    %v2731 = vadd.f32 %v2682, %v2730
    %v2732 = vpop.f32.mrf.mxu0
    %v2733 = vadd.f32 %v2684, %v2732
    %2734 = vmatmul.bf16.gmra.mxu0 %v2331
    %v2735 = vpop.f32.mrf.mxu0
    %v2736 = vadd.f32 %v2687, %v2735
    %v2737 = vpop.f32.mrf.mxu0
    %v2738 = vadd.f32 %v2689, %v2737
    %2739 = vdwg.mxu0
    %2740 = vmatpush.bf16.msra.mxu0 %v2560
    %2741 = vmatpush.bf16.msra.mxu0 %v2559
    %2742 = vmatpush.bf16.msra.mxu0 %v2558
    %2743 = vmatpush.bf16.msra.mxu0 %v2557
    %2744 = vmatpush.bf16.msra.mxu0 %v2556
    %2745 = vmatpush.bf16.msra.mxu0 %v2555
    %2746 = vmatpush.bf16.msra.mxu0 %v2554
    %2747 = vmatpush.bf16.msra.mxu0 %v2553
    %2748 = vmatmul.bf16.gmra.mxu0 %v2304
    %v2749 = vpop.f32.mrf.mxu0
    %v2750 = vadd.f32 %v2701, %v2749
    %v2751 = vpop.f32.mrf.mxu0
    %v2752 = vadd.f32 %v2703, %v2751
    %2753 = vmatmul.bf16.gmra.mxu0 %v2308
    %v2754 = vpop.f32.mrf.mxu0
    %v2755 = vadd.f32 %v2706, %v2754
    %v2756 = vpop.f32.mrf.mxu0
    %v2757 = vadd.f32 %v2708, %v2756
    %2758 = vmatmul.bf16.gmra.mxu0 %v2312
    %v2759 = vpop.f32.mrf.mxu0
    %v2760 = vadd.f32 %v2711, %v2759
    %v2761 = vpop.f32.mrf.mxu0
    %v2762 = vadd.f32 %v2713, %v2761
    %2763 = vmatmul.bf16.gmra.mxu0 %v2316
    %v2764 = vpop.f32.mrf.mxu0
    %v2765 = vadd.f32 %v2716, %v2764
    %v2766 = vpop.f32.mrf.mxu0
    %v2767 = vadd.f32 %v2718, %v2766
    %2768 = vmatmul.bf16.gmra.mxu0 %v2320
    %v2769 = vpop.f32.mrf.mxu0
    %v2770 = vadd.f32 %v2721, %v2769
    %v2771 = vpop.f32.mrf.mxu0
    %v2772 = vadd.f32 %v2723, %v2771
    %2773 = vmatmul.bf16.gmra.mxu0 %v2324
    %v2774 = vpop.f32.mrf.mxu0
    %v2775 = vadd.f32 %v2726, %v2774
    %v2776 = vpop.f32.mrf.mxu0
    %v2777 = vadd.f32 %v2728, %v2776
    %2778 = vmatmul.bf16.gmra.mxu0 %v2328
    %v2779 = vpop.f32.mrf.mxu0
    %v2780 = vadd.f32 %v2731, %v2779
    %v2781 = vpop.f32.mrf.mxu0
    %v2782 = vadd.f32 %v2733, %v2781
    %2783 = vmatmul.bf16.gmra.mxu0 %v2332
    %v2784 = vpop.f32.mrf.mxu0
    %v2785 = vadd.f32 %v2736, %v2784
    %v2786 = vpop.f32.mrf.mxu0
    %v2787 = vadd.f32 %v2738, %v2786
    %2788 = vdwg.mxu0
    %2789 = vmax.xlane.f32.xlu0 %v2750
    %v2790 = vpop.xlane.xlu0 %2789
    %2791 = vmax.xlane.f32.xlu0 %v2752
    %v2792 = vpop.xlane.xlu0 %2791
    %2793 = vmax.xlane.f32.xlu0 %v2755
    %v2794 = vpop.xlane.xlu0 %2793
    %2795 = vmax.xlane.f32.xlu0 %v2757
    %v2796 = vpop.xlane.xlu0 %2795
    %2797 = vmax.xlane.f32.xlu0 %v2760
    %v2798 = vpop.xlane.xlu0 %2797
    %2799 = vmax.xlane.f32.xlu0 %v2762
    %v2800 = vpop.xlane.xlu0 %2799
    %2801 = vmax.xlane.f32.xlu0 %v2765
    %v2802 = vpop.xlane.xlu0 %2801
    %2803 = vmax.xlane.f32.xlu0 %v2767
    %v2804 = vpop.xlane.xlu0 %2803
    %2805 = vmax.xlane.f32.xlu0 %v2770
    %v2806 = vpop.xlane.xlu0 %2805
    %2807 = vmax.xlane.f32.xlu0 %v2772
    %v2808 = vpop.xlane.xlu0 %2807
    %2809 = vmax.xlane.f32.xlu0 %v2775
    %v2810 = vpop.xlane.xlu0 %2809
    %2811 = vmax.xlane.f32.xlu0 %v2777
    %v2812 = vpop.xlane.xlu0 %2811
    %2813 = vmax.xlane.f32.xlu0 %v2780
    %v2814 = vpop.xlane.xlu0 %2813
    %2815 = vmax.xlane.f32.xlu0 %v2782
    %v2816 = vpop.xlane.xlu0 %2815
    %2817 = vmax.xlane.f32.xlu0 %v2785
    %v2818 = vpop.xlane.xlu0 %2817
    %2819 = vmax.xlane.f32.xlu0 %v2787
    %v2820 = vpop.xlane.xlu0 %2819
    %v2821 = vsub.f32 %v2750, %v2790
    %v2822 = vsub.f32 %v2752, %v2792
    %v2823 = vsub.f32 %v2755, %v2794
    %v2824 = vsub.f32 %v2757, %v2796
    %v2825 = vsub.f32 %v2760, %v2798
    %v2826 = vsub.f32 %v2762, %v2800
    %v2827 = vsub.f32 %v2765, %v2802
    %v2828 = vsub.f32 %v2767, %v2804
    %v2829 = vsub.f32 %v2770, %v2806
    %v2830 = vsub.f32 %v2772, %v2808
    %v2831 = vsub.f32 %v2775, %v2810
    %v2832 = vsub.f32 %v2777, %v2812
    %v2833 = vsub.f32 %v2780, %v2814
    %v2834 = vsub.f32 %v2782, %v2816
    %v2835 = vsub.f32 %v2785, %v2818
    %v2836 = vsub.f32 %v2787, %v2820
    %v2837 = vmul.f32 %v2821, 1.442695
    %v2838 = vpow.pop %v2837
    %v2839 = vmul.f32 %v2822, 1.442695
    %v2840 = vpow.pop %v2839
    %v2841 = vmul.f32 %v2823, 1.442695
    %v2842 = vpow.pop %v2841
    %v2843 = vmul.f32 %v2824, 1.442695
    %v2844 = vpow.pop %v2843
    %v2845 = vmul.f32 %v2825, 1.442695
    %v2846 = vpow.pop %v2845
    %v2847 = vmul.f32 %v2826, 1.442695
    %v2848 = vpow.pop %v2847
    %v2849 = vmul.f32 %v2827, 1.442695
    %v2850 = vpow.pop %v2849
    %v2851 = vmul.f32 %v2828, 1.442695
    %v2852 = vpow.pop %v2851
    %v2853 = vmul.f32 %v2829, 1.442695
    %v2854 = vpow.pop %v2853
    %v2855 = vmul.f32 %v2830, 1.442695
    %v2856 = vpow.pop %v2855
    %v2857 = vmul.f32 %v2831, 1.442695
    %v2858 = vpow.pop %v2857
    %v2859 = vmul.f32 %v2832, 1.442695
    %v2860 = vpow.pop %v2859
    %v2861 = vmul.f32 %v2833, 1.442695
    %v2862 = vpow.pop %v2861
    %v2863 = vmul.f32 %v2834, 1.442695
    %v2864 = vpow.pop %v2863
    %v2865 = vmul.f32 %v2835, 1.442695
    %v2866 = vpow.pop %v2865
    %v2867 = vmul.f32 %v2836, 1.442695
    %v2868 = vpow.pop %v2867
    %2869 = vadd.xlane.f32.xlu0 %v2838
    %v2870 = vpop.xlane.xlu0 %2869
    %2871 = vadd.xlane.f32.xlu0 %v2840
    %v2872 = vpop.xlane.xlu0 %2871
    %2873 = vadd.xlane.f32.xlu0 %v2842
    %v2874 = vpop.xlane.xlu0 %2873
    %2875 = vadd.xlane.f32.xlu0 %v2844
    %v2876 = vpop.xlane.xlu0 %2875
    %2877 = vadd.xlane.f32.xlu0 %v2846
    %v2878 = vpop.xlane.xlu0 %2877
    %2879 = vadd.xlane.f32.xlu0 %v2848
    %v2880 = vpop.xlane.xlu0 %2879
    %2881 = vadd.xlane.f32.xlu0 %v2850
    %v2882 = vpop.xlane.xlu0 %2881
    %2883 = vadd.xlane.f32.xlu0 %v2852
    %v2884 = vpop.xlane.xlu0 %2883
    %2885 = vadd.xlane.f32.xlu0 %v2854
    %v2886 = vpop.xlane.xlu0 %2885
    %2887 = vadd.xlane.f32.xlu0 %v2856
    %v2888 = vpop.xlane.xlu0 %2887
    %2889 = vadd.xlane.f32.xlu0 %v2858
    %v2890 = vpop.xlane.xlu0 %2889
    %2891 = vadd.xlane.f32.xlu0 %v2860
    %v2892 = vpop.xlane.xlu0 %2891
    %2893 = vadd.xlane.f32.xlu0 %v2862
    %v2894 = vpop.xlane.xlu0 %2893
    %2895 = vadd.xlane.f32.xlu0 %v2864
    %v2896 = vpop.xlane.xlu0 %2895
    %2897 = vadd.xlane.f32.xlu0 %v2866
    %v2898 = vpop.xlane.xlu0 %2897
    %2899 = vadd.xlane.f32.xlu0 %v2868
    %v2900 = vpop.xlane.xlu0 %2899
    %v2901 = vrcp.pop %v2870
    %v2902 = vrcp.pop %v2872
    %v2903 = vrcp.pop %v2874
    %v2904 = vrcp.pop %v2876
    %v2905 = vrcp.pop %v2878
    %v2906 = vrcp.pop %v2880
    %v2907 = vrcp.pop %v2882
    %v2908 = vrcp.pop %v2884
    %v2909 = vrcp.pop %v2886
    %v2910 = vrcp.pop %v2888
    %v2911 = vrcp.pop %v2890
    %v2912 = vrcp.pop %v2892
    %v2913 = vrcp.pop %v2894
    %v2914 = vrcp.pop %v2896
    %v2915 = vrcp.pop %v2898
    %v2916 = vrcp.pop %v2900
    %v2917 = vmul.f32 %v2838, %v2901
    %v2918 = vmul.f32 %v2840, %v2902
    %v2919 = vmul.f32 %v2842, %v2903
    %v2920 = vmul.f32 %v2844, %v2904
    %v2921 = vmul.f32 %v2846, %v2905
    %v2922 = vmul.f32 %v2848, %v2906
    %v2923 = vmul.f32 %v2850, %v2907
    %v2924 = vmul.f32 %v2852, %v2908
    %v2925 = vmul.f32 %v2854, %v2909
    %v2926 = vmul.f32 %v2856, %v2910
    %v2927 = vmul.f32 %v2858, %v2911
    %v2928 = vmul.f32 %v2860, %v2912
    %v2929 = vmul.f32 %v2862, %v2913
    %v2930 = vmul.f32 %v2864, %v2914
    %v2931 = vmul.f32 %v2866, %v2915
    %v2932 = vmul.f32 %v2868, %v2916
    %2933 = vst [vmem:[#allocation13] sm:$0xff] %v2917
    %2934 = vst [vmem:[#allocation13 + $0x8] sm:$0xff] %v2918
    %2935 = vst [vmem:[#allocation13 + $0x10] sm:$0xff] %v2919
    %2936 = vst [vmem:[#allocation13 + $0x18] sm:$0xff] %v2920
    %2937 = vst [vmem:[#allocation13 + $0x20] sm:$0xff] %v2921
    %2938 = vst [vmem:[#allocation13 + $0x28] sm:$0xff] %v2922
    %2939 = vst [vmem:[#allocation13 + $0x30] sm:$0xff] %v2923
    %2940 = vst [vmem:[#allocation13 + $0x38] sm:$0xff] %v2924
    %2941 = vst [vmem:[#allocation13 + $0x40] sm:$0xff] %v2925
    %2942 = vst [vmem:[#allocation13 + $0x48] sm:$0xff] %v2926
    %2943 = vst [vmem:[#allocation13 + $0x50] sm:$0xff] %v2927
    %2944 = vst [vmem:[#allocation13 + $0x58] sm:$0xff] %v2928
    %2945 = vst [vmem:[#allocation13 + $0x60] sm:$0xff] %v2929
    %2946 = vst [vmem:[#allocation13 + $0x68] sm:$0xff] %v2930
    %2947 = vst [vmem:[#allocation13 + $0x70] sm:$0xff] %v2931
    %2948 = vst [vmem:[#allocation13 + $0x78] sm:$0xff] %v2932
    // Predicated region
    $region54: #{tpu_custom_call.1} parent=1 // pred_check
      _
    $region55: #{tpu_custom_call.1} parent=1 // pred_check_branch
      %2950 = sbr.rel (0) target = $region57
    $region56: #{tpu_custom_call.1} parent=1 // pred_region
      %2952 = vsyncadd [#allocation4], 0
      %s2953 = sshll.u32 [#allocation13], 4
      %s2954 = int_to_ptr.vmem [resolvable:$true] %s2953
      %s2955 = sshll.u32 %s7, 4
      %s2956 = int_to_ptr.hbm [resolvable:$true] %s2955
      %2961 = dma.vmem_to_hbm [thread:$0]  %s2954, 2048, %s2956, [#allocation4], 128, 128, 8
    $region57: #{tpu_custom_call.1} parent=1 // pred_fallthru
      _
    // Predicated region
    $region58: #{tpu_custom_call.1} parent=1 // pred_check
      _
    $region59: #{tpu_custom_call.1} parent=1 // pred_check_branch
      %2963 = sbr.rel (0) target = $region61
    $region60: #{tpu_custom_call.1} parent=1 // pred_region
      %2965 = dma.done [#allocation4], 2048
    $region61: #{tpu_custom_call.1} parent=1 // pred_fallthru
      _
    %2966 = vsyncpa [#allocation3], 1
    %2967 = vsyncpa [#allocation6], 1
    %2968 = vsyncpa [#allocation9], 1
    %2969 = vsyncpa [#allocation12], 1
    %2970 = vsyncpa [#allocation4], 1

</llo_original>
